<compile_context>
chip_gen: v5e
topology: v5e:2x2
jax: 0.10.0
libtpu: 0.0.40
codegen_flags: <defaults>
</compile_context>

<pallas_src>
import numpy as np
import jax
import jax.numpy as jnp
from jax.experimental import pallas as pl
from jax.experimental.pallas import tpu as pltpu

F32 = jnp.float32
VMEM_SPEC = pl.BlockSpec(memory_space=pltpu.MemorySpace.VMEM)
BN_EPS = 1e-5


# ----------------------------------------------------------------------------
# Parameter preparation (runs once, outside the jitted forward)
# ----------------------------------------------------------------------------
def _tap_col_mats(w, win, stride, padding, output_padding):
    """Per row-tap kh: Bh_kh of shape (Ci*Win, Co*Wout).

    Bh_kh[(ci,iw),(co,ow)] = sum_kw w[ci,co,kh,kw] * [ow == iw*stride - padding + kw]
    i.e. channel mixing + the W-axis scatter of a ConvTranspose2d, boundary-clipped.
    """
    w = np.asarray(w, np.float32)
    ci, co, k, _ = w.shape
    wout = (win - 1) * stride - 2 * padding + k + output_padding
    m = np.zeros((k, ci, win, co, wout), np.float32)
    for kh in range(k):
        for iw in range(win):
            for kw in range(k):
                ow = iw * stride - padding + kw
                if 0 <= ow < wout:
                    m[kh, :, iw, :, ow] += w[:, :, kh, kw]
    return m.reshape(k, ci * win, co * wout)


def _tap_row_scatter(hin, stride, padding, output_padding, k, batch, out_n_major=False):
    """Per row-tap kh: 0/1 matrix (rows_out, rows_in) scattering rows (ih, n)
    [h-major, idx = ih*B + n] to rows (oh, n) [h-major] or (n, oh) [n-major]."""
    hout = (hin - 1) * stride - 2 * padding + k + output_padding
    p = np.zeros((k, hout * batch, hin * batch), np.float32)
    for kh in range(k):
        for ih in range(hin):
            oh = ih * stride - padding + kh
            if 0 <= oh < hout:
                for n in range(batch):
                    r_out = (n * hout + oh) if out_n_major else (oh * batch + n)
                    p[kh, r_out, ih * batch + n] = 1.0
    return p


def _channel_pool_mats(co, w):
    """0/1 matrices for lanes ordered (c, w): A (co*w, co) sums lanes per channel;
    A.T broadcasts per-channel scalars back to lanes."""
    a = np.kron(np.eye(co, dtype=np.float32), np.ones((w, 1), np.float32))
    return jnp.asarray(a), jnp.asarray(np.ascontiguousarray(a.T))


def init_raw_params(key, encoded_space_dim):
    """Raw parameters in PyTorch layout (smoke-test init, not torch default)."""
    ks = jax.random.split(key, 10)
    rnd = lambda k, shape, s=0.1: s * jax.random.normal(k, shape, F32)
    return {
        "lin1_w": rnd(ks[0], (128, encoded_space_dim)), "lin1_b": rnd(ks[1], (128,)),
        "lin2_w": rnd(ks[2], (3 * 3 * 32, 128)),        "lin2_b": rnd(ks[3], (288,)),
        "d1_w": rnd(ks[4], (32, 16, 3, 3)), "d1_b": rnd(ks[5], (16,), 0.05),
        "bn1_g": jnp.ones((16,), F32),      "bn1_b": jnp.zeros((16,), F32),
        "d2_w": rnd(ks[6], (16, 8, 3, 3)),  "d2_b": rnd(ks[7], (8,), 0.05),
        "bn2_g": jnp.ones((8,), F32),       "bn2_b": jnp.zeros((8,), F32),
        "d3_w": rnd(ks[8], (8, 1, 3, 3)),   "d3_b": rnd(ks[9], (1,), 0.05),
    }


def prepare_params(raw, batch):
    """One-time weight transforms.  The tiny row-scatter matrices depend on batch."""
    B = batch
    # decoder_lin layer 2 re-blocked by output height h; columns ordered (c, w) so
    # its output rows land directly in the deconv1 (rows=(h,n), lanes=(c,w)) layout.
    w2 = np.asarray(raw["lin2_w"], np.float32)          # (288, 128), rows = (c, h, w)
    b2 = np.asarray(raw["lin2_b"], np.float32)
    w2b = np.zeros((3, 128, 96), np.float32)
    b2b = np.zeros((3, 1, 96), np.float32)
    for h in range(3):
        for c in range(32):
            for wcol in range(3):
                src = c * 9 + h * 3 + wcol
                dst = c * 3 + wcol
                w2b[h, :, dst] = w2[src, :]
                b2b[h, 0, dst] = b2[src]

    bh1 = _tap_col_mats(raw["d1_w"], 3, 2, 0, 0)         # (3,  96, 112)
    bh2 = _tap_col_mats(raw["d2_w"], 7, 2, 1, 1)         # (3, 112, 112)
    bh3 = _tap_col_mats(raw["d3_w"], 14, 2, 1, 1)        # (3, 112,  28)
    p1 = _tap_row_scatter(3, 2, 0, 0, 3, B)              # (3,  7B, 3B)
    p2 = _tap_row_scatter(7, 2, 1, 1, 3, B)              # (3, 14B, 7B)
    p3 = _tap_row_scatter(14, 2, 1, 1, 3, B, out_n_major=True)   # (3, 28B, 14B)
    pa1, pat1 = _channel_pool_mats(16, 7)
    pa2, pat2 = _channel_pool_mats(8, 14)

    rep = lambda b, n: jnp.asarray(np.repeat(np.asarray(b, np.float32), n)[None, :])
    return {
        # decoder_lin (f32, tiny)
        "w1": raw["lin1_w"].T, "b1": raw["lin1_b"].reshape(1, -1),
        "w2b": jnp.asarray(w2b), "b2b": jnp.asarray(b2b),
        # deconv1 + BN1
        "bh1": jnp.asarray(bh1), "p1": jnp.asarray(p1), "c1": rep(raw["d1_b"], 7),
        "pa1": pa1, "pat1": pat1,
        "g1": raw["bn1_g"].reshape(1, -1), "be1": raw["bn1_b"].reshape(1, -1),
        # deconv2 + BN2
        "bh2": jnp.asarray(bh2), "p2": jnp.asarray(p2), "c2": rep(raw["d2_b"], 14),
        "pa2": pa2, "pat2": pat2,
        "g2": raw["bn2_g"].reshape(1, -1), "be2": raw["bn2_b"].reshape(1, -1),
        # deconv3 (+ sigmoid)
        "bh3": jnp.asarray(bh3), "p3": jnp.asarray(p3), "c3": rep(raw["d3_b"], 28),
    }


# ----------------------------------------------------------------------------
# The fused Pallas kernel
# ----------------------------------------------------------------------------
def _decoder_kernel(x_ref, w1_ref, b1_ref, w2b_ref, b2b_ref,
                    bh1_ref, p1_ref, c1_ref, pa1_ref, pat1_ref, g1_ref, be1_ref,
                    bh2_ref, p2_ref, c2_ref, pa2_ref, pat2_ref, g2_ref, be2_ref,
                    bh3_ref, p3_ref, c3_ref,
                    o_ref, a1_scr):
    B = x_ref.shape[0]

    # ---- decoder_lin: Linear -> ReLU -> Linear -> ReLU (all f32) ----
    h1 = jnp.maximum(
        jnp.dot(x_ref[...], w1_ref[...], preferred_element_type=F32) + b1_ref[...], 0.0)
    # Second Linear computed per output-height block so its rows land directly in the
    # (rows=(h, n), lanes=(c, w)) layout used by the deconv stages (no reshape).
    for h in range(3):
        blk = jnp.maximum(
            jnp.dot(h1, w2b_ref[h], preferred_element_type=F32) + b2b_ref[h], 0.0)
        a1_scr[h * B:(h + 1) * B, :] = blk                 # rows (h, n), lanes (c, w)
    a = a1_scr[...]                                        # (3B, 96)

    def deconv(t, bh_ref, p_ref, c_ref):
        # ConvTranspose2d as 3 row-taps: channel-mix + W-scatter matmul (Bh_kh),
        # then a tiny 0/1 row-scatter matmul (P_kh).  Bias added once at the end.
        out = None
        for kh in range(3):
            z = jnp.dot(t, bh_ref[kh], preferred_element_type=F32)    # (rows_in,  Co*Wo)
            y = jnp.dot(p_ref[kh], z, preferred_element_type=F32)     # (rows_out, Co*Wo)
            out = y if out is None else out + y
        return out + c_ref[...]

    def bn_relu(t, pa_ref, pat_ref, g_ref, be_ref):
        # BatchNorm2d (training-mode batch stats, biased var) + ReLU.
        # Stats matmuls fused: [colsum; colsq] -> one dot, [scale; shift] -> one dot.
        # NOTE: single-pass E[x^2]-mean^2 in f32; fine at these activation scales.
        # NOTE: cnt bakes this block's batch rows into the stats -- revisit if a
        # batch grid axis is added (stats must then span the whole batch).
        co = pa_ref.shape[1]
        cnt = float(t.shape[0] * (t.shape[1] // co))        # N * H * W
        stats = jnp.concatenate(
            [jnp.sum(t, axis=0, keepdims=True),
             jnp.sum(t * t, axis=0, keepdims=True)], axis=0)            # (2, F)
        s = jnp.dot(stats, pa_ref[...], preferred_element_type=F32)     # (2, Co)
        mean = s[0:1, :] / cnt
        var = jnp.maximum(s[1:2, :] / cnt - mean * mean, 0.0)
        inv = jax.lax.rsqrt(var + BN_EPS)
        scale = g_ref[...] * inv                                        # (1, Co)
        shift = be_ref[...] - mean * scale                              # (1, Co)
        sf = jnp.dot(jnp.concatenate([scale, shift], axis=0), pat_ref[...],
                     preferred_element_type=F32)                        # (2, F)
        return jnp.maximum(t * sf[0:1, :] + sf[1:2, :], 0.0)

    t = deconv(a, bh1_ref, p1_ref, c1_ref)                 # (B*7,  112) = (16, 7)  per row
    t = bn_relu(t, pa1_ref, pat1_ref, g1_ref, be1_ref)
    t = deconv(t, bh2_ref, p2_ref, c2_ref)                 # (B*14, 112) = (8, 14)  per row
    t = bn_relu(t, pa2_ref, pat2_ref, g2_ref, be2_ref)
    t = deconv(t, bh3_ref, p3_ref, c3_ref)                 # (B*28, 28), rows = (n, oh)
    o_ref[...] = jax.nn.sigmoid(t)


def decoder_forward(x, p):
    B = x.shape[0]
    out = pl.pallas_call(
        _decoder_kernel,
        out_shape=jax.ShapeDtypeStruct((B * 28, 28), F32),
        in_specs=[VMEM_SPEC] * 22,
        out_specs=VMEM_SPEC,
        scratch_shapes=[pltpu.VMEM((3 * B, 96), F32)],
    )(x, p["w1"], p["b1"], p["w2b"], p["b2b"],
      p["bh1"], p["p1"], p["c1"], p["pa1"], p["pat1"], p["g1"], p["be1"],
      p["bh2"], p["p2"], p["c2"], p["pa2"], p["pat2"], p["g2"], p["be2"],
      p["bh3"], p["p3"], p["c3"])
    # rows are (n, oh), lanes are ow  ->  (B, 1, 28, 28) is a metadata-only reshape.
    return out.reshape(B, 1, 28, 28)


# ----------------------------------------------------------------------------
# Pure-jnp f32 reference (independent dilate/pad path) for correctness check
# ----------------------------------------------------------------------------
def _decoder_reference(x, raw):
    h = jnp.maximum(x @ raw["lin1_w"].T + raw["lin1_b"], 0.0)
    h = jnp.maximum(h @ raw["lin2_w"].T + raw["lin2_b"], 0.0)
    h = h.reshape(x.shape[0], 32, 3, 3)                         # NCHW

    def conv_t(xn, w, b, stride, pad, opad):
        ci, co, k, _ = w.shape
        n, _, hin, win = xn.shape
        hd, wd = (hin - 1) * stride + 1, (win - 1) * stride + 1
        xd = jnp.zeros((n, ci, hd, wd), xn.dtype).at[:, :, ::stride, ::stride].set(xn)
        lo, hi = k - 1 - pad, k - 1 - pad + opad
        xp = jnp.pad(xd, ((0, 0), (0, 0), (lo, hi), (lo, hi)))
        ho, wo = xp.shape[2] - k + 1, xp.shape[3] - k + 1
        wf = w[:, :, ::-1, ::-1]
        out = jnp.zeros((n, co, ho, wo), F32)
        for kh in range(k):
            for kw in range(k):
                patch = xp[:, :, kh:kh + ho, kw:kw + wo]
                out = out + jnp.einsum("nchw,cd->ndhw", patch, wf[:, :, kh, kw])
        return out + b.reshape(1, co, 1, 1)

    def bn(xn, g, b):
        mean = jnp.mean(xn, axis=(0, 2, 3), keepdims=True)
        var = jnp.mean((xn - mean) ** 2, axis=(0, 2, 3), keepdims=True)
        return (xn - mean) * jax.lax.rsqrt(var + BN_EPS) * g.reshape(1, -1, 1, 1) \
               + b.reshape(1, -1, 1, 1)

    h = jnp.maximum(bn(conv_t(h, raw["d1_w"], raw["d1_b"], 2, 0, 0),
                       raw["bn1_g"], raw["bn1_b"]), 0.0)
    h = jnp.maximum(bn(conv_t(h, raw["d2_w"], raw["d2_b"], 2, 1, 1),
                       raw["bn2_g"], raw["bn2_b"]), 0.0)
    h = conv_t(h, raw["d3_w"], raw["d3_b"], 2, 1, 1)
    return jax.nn.sigmoid(h)


# ----------------------------------------------------------------------------
if __name__ == "__main__":
    encoded_space_dim, batch = 4, 2          # fc2_input_dim unused in forward
    key = jax.random.PRNGKey(0)
    kx, kp = jax.random.split(key)
    x = jax.random.normal(kx, (batch, encoded_space_dim), F32)

    raw = init_raw_params(kp, encoded_space_dim)
    params = prepare_params(raw, batch)      # one-time weight transforms

    out = jax.block_until_ready(jax.jit(decoder_forward)(x, params))

    assert out.shape == (batch, 1, 28, 28), out.shape
    assert bool(jnp.all(jnp.isfinite(out)))
    assert bool(jnp.all((out >= 0.0) & (out <= 1.0)))            # sigmoid range

    # Numerical check vs independent f32 reference.  Weights are no longer quantized
    # to bf16, so the tolerance is tightened vs the previous version (5e-2 -> 2e-2);
    # residual error comes only from MXU pass precision / summation order.
    ref = _decoder_reference(x, raw)
    max_err = float(jnp.max(jnp.abs(out - ref)))
    assert max_err < 2e-2, f"max abs err vs f32 reference: {max_err}"

    print("KERNEL_OK")
</pallas_src>

<mosaic_0001>
module attributes {stable_mosaic.version = 11 : i64} {
  func.func @_decoder_kernel(%arg0: memref<2x4xf32, #tpu.memory_space<vmem>>, %arg1: memref<4x128xf32, #tpu.memory_space<vmem>>, %arg2: memref<1x128xf32, #tpu.memory_space<vmem>>, %arg3: memref<3x128x96xf32, #tpu.memory_space<vmem>>, %arg4: memref<3x1x96xf32, #tpu.memory_space<vmem>>, %arg5: memref<3x96x112xf32, #tpu.memory_space<vmem>>, %arg6: memref<3x14x6xf32, #tpu.memory_space<vmem>>, %arg7: memref<1x112xf32, #tpu.memory_space<vmem>>, %arg8: memref<112x16xf32, #tpu.memory_space<vmem>>, %arg9: memref<16x112xf32, #tpu.memory_space<vmem>>, %arg10: memref<1x16xf32, #tpu.memory_space<vmem>>, %arg11: memref<1x16xf32, #tpu.memory_space<vmem>>, %arg12: memref<3x112x112xf32, #tpu.memory_space<vmem>>, %arg13: memref<3x28x14xf32, #tpu.memory_space<vmem>>, %arg14: memref<1x112xf32, #tpu.memory_space<vmem>>, %arg15: memref<112x8xf32, #tpu.memory_space<vmem>>, %arg16: memref<8x112xf32, #tpu.memory_space<vmem>>, %arg17: memref<1x8xf32, #tpu.memory_space<vmem>>, %arg18: memref<1x8xf32, #tpu.memory_space<vmem>>, %arg19: memref<3x112x28xf32, #tpu.memory_space<vmem>>, %arg20: memref<3x56x28xf32, #tpu.memory_space<vmem>>, %arg21: memref<1x28xf32, #tpu.memory_space<vmem>>, %arg22: memref<56x28xf32, #tpu.memory_space<vmem>>, %arg23: memref<6x96xf32, #tpu.memory_space<vmem>>) attributes {dimension_semantics = [], scalar_prefetch = 0 : i64, scratch_operands = 1 : i64, tpu.core_type = #tpu.core_type<tc>} {
    %c0 = arith.constant 0 : index
    %c0_0 = arith.constant 0 : index
    %0 = vector.load %arg0[%c0, %c0_0] : memref<2x4xf32, #tpu.memory_space<vmem>>, vector<2x4xf32>
    %c0_1 = arith.constant 0 : index
    %c0_2 = arith.constant 0 : index
    %1 = vector.load %arg1[%c0_1, %c0_2] : memref<4x128xf32, #tpu.memory_space<vmem>>, vector<4x128xf32>
    %cst = arith.constant dense<0.000000e+00> : vector<2x128xf32>
    %2 = tpu.matmul %0, %1, %cst {dimension_numbers = #tpu.dot_dimension_numbers<[1], [0], [0], [1], [0, 0, 1, 1], [], []>} : vector<2x4xf32>, vector<4x128xf32>, vector<2x128xf32> -> vector<2x128xf32>
    %c0_3 = arith.constant 0 : index
    %c0_4 = arith.constant 0 : index
    %3 = vector.load %arg2[%c0_3, %c0_4] : memref<1x128xf32, #tpu.memory_space<vmem>>, vector<1x128xf32>
    %4 = vector.broadcast %3 : vector<1x128xf32> to vector<2x128xf32>
    %5 = arith.addf %2, %4 : vector<2x128xf32>
    %cst_5 = arith.constant 0.000000e+00 : f32
    %6 = vector.broadcast %cst_5 : f32 to vector<2x128xf32>
    %7 = arith.maximumf %5, %6 : vector<2x128xf32>
    %c0_6 = arith.constant 0 : index
    %c0_7 = arith.constant 0 : index
    %c0_8 = arith.constant 0 : index
    %8 = vector.load %arg3[%c0_6, %c0_7, %c0_8] : memref<3x128x96xf32, #tpu.memory_space<vmem>>, vector<1x128x96xf32>
    %9 = vector.shape_cast %8 : vector<1x128x96xf32> to vector<128x96xf32>
    %cst_9 = arith.constant dense<0.000000e+00> : vector<2x96xf32>
    %10 = tpu.matmul %7, %9, %cst_9 {dimension_numbers = #tpu.dot_dimension_numbers<[1], [0], [0], [1], [0, 0, 1, 1], [], []>} : vector<2x128xf32>, vector<128x96xf32>, vector<2x96xf32> -> vector<2x96xf32>
    %c0_10 = arith.constant 0 : index
    %c0_11 = arith.constant 0 : index
    %c0_12 = arith.constant 0 : index
    %11 = vector.load %arg4[%c0_10, %c0_11, %c0_12] : memref<3x1x96xf32, #tpu.memory_space<vmem>>, vector<1x1x96xf32>
    %12 = vector.shape_cast %11 : vector<1x1x96xf32> to vector<1x96xf32>
    %13 = vector.broadcast %12 : vector<1x96xf32> to vector<2x96xf32>
    %14 = arith.addf %10, %13 : vector<2x96xf32>
    %cst_13 = arith.constant 0.000000e+00 : f32
    %15 = vector.broadcast %cst_13 : f32 to vector<2x96xf32>
    %16 = arith.maximumf %14, %15 : vector<2x96xf32>
    %c0_14 = arith.constant 0 : index
    %c0_15 = arith.constant 0 : index
    %17 = vector.load %arg23[%c0_14, %c0_15] : memref<6x96xf32, #tpu.memory_space<vmem>>, vector<2x96xf32>
    tpu.vector_store %arg23[%c0_14, %c0_15], %16 {strides = array<i32>} : memref<6x96xf32, #tpu.memory_space<vmem>>, vector<2x96xf32>,
    %c1 = arith.constant 1 : index
    %c0_16 = arith.constant 0 : index
    %c0_17 = arith.constant 0 : index
    %18 = vector.load %arg3[%c1, %c0_16, %c0_17] : memref<3x128x96xf32, #tpu.memory_space<vmem>>, vector<1x128x96xf32>
    %19 = vector.shape_cast %18 : vector<1x128x96xf32> to vector<128x96xf32>
    %cst_18 = arith.constant dense<0.000000e+00> : vector<2x96xf32>
    %20 = tpu.matmul %7, %19, %cst_18 {dimension_numbers = #tpu.dot_dimension_numbers<[1], [0], [0], [1], [0, 0, 1, 1], [], []>} : vector<2x128xf32>, vector<128x96xf32>, vector<2x96xf32> -> vector<2x96xf32>
    %c1_19 = arith.constant 1 : index
    %c0_20 = arith.constant 0 : index
    %c0_21 = arith.constant 0 : index
    %21 = vector.load %arg4[%c1_19, %c0_20, %c0_21] : memref<3x1x96xf32, #tpu.memory_space<vmem>>, vector<1x1x96xf32>
    %22 = vector.shape_cast %21 : vector<1x1x96xf32> to vector<1x96xf32>
    %23 = vector.broadcast %22 : vector<1x96xf32> to vector<2x96xf32>
    %24 = arith.addf %20, %23 : vector<2x96xf32>
    %cst_22 = arith.constant 0.000000e+00 : f32
    %25 = vector.broadcast %cst_22 : f32 to vector<2x96xf32>
    %26 = arith.maximumf %24, %25 : vector<2x96xf32>
    %c2 = arith.constant 2 : index
    %c0_23 = arith.constant 0 : index
    %27 = vector.load %arg23[%c2, %c0_23] : memref<6x96xf32, #tpu.memory_space<vmem>>, vector<2x96xf32>
    tpu.vector_store %arg23[%c2, %c0_23], %26 {strides = array<i32>} : memref<6x96xf32, #tpu.memory_space<vmem>>, vector<2x96xf32>,
    %c2_24 = arith.constant 2 : index
    %c0_25 = arith.constant 0 : index
    %c0_26 = arith.constant 0 : index
    %28 = vector.load %arg3[%c2_24, %c0_25, %c0_26] : memref<3x128x96xf32, #tpu.memory_space<vmem>>, vector<1x128x96xf32>
    %29 = vector.shape_cast %28 : vector<1x128x96xf32> to vector<128x96xf32>
    %cst_27 = arith.constant dense<0.000000e+00> : vector<2x96xf32>
    %30 = tpu.matmul %7, %29, %cst_27 {dimension_numbers = #tpu.dot_dimension_numbers<[1], [0], [0], [1], [0, 0, 1, 1], [], []>} : vector<2x128xf32>, vector<128x96xf32>, vector<2x96xf32> -> vector<2x96xf32>
    %c2_28 = arith.constant 2 : index
    %c0_29 = arith.constant 0 : index
    %c0_30 = arith.constant 0 : index
    %31 = vector.load %arg4[%c2_28, %c0_29, %c0_30] : memref<3x1x96xf32, #tpu.memory_space<vmem>>, vector<1x1x96xf32>
    %32 = vector.shape_cast %31 : vector<1x1x96xf32> to vector<1x96xf32>
    %33 = vector.broadcast %32 : vector<1x96xf32> to vector<2x96xf32>
    %34 = arith.addf %30, %33 : vector<2x96xf32>
    %cst_31 = arith.constant 0.000000e+00 : f32
    %35 = vector.broadcast %cst_31 : f32 to vector<2x96xf32>
    %36 = arith.maximumf %34, %35 : vector<2x96xf32>
    %c4 = arith.constant 4 : index
    %c0_32 = arith.constant 0 : index
    %37 = vector.load %arg23[%c4, %c0_32] : memref<6x96xf32, #tpu.memory_space<vmem>>, vector<2x96xf32>
    tpu.vector_store %arg23[%c4, %c0_32], %36 {strides = array<i32>} : memref<6x96xf32, #tpu.memory_space<vmem>>, vector<2x96xf32>,
    %c0_33 = arith.constant 0 : index
    %c0_34 = arith.constant 0 : index
    %38 = vector.load %arg23[%c0_33, %c0_34] : memref<6x96xf32, #tpu.memory_space<vmem>>, vector<6x96xf32>
    %c0_35 = arith.constant 0 : index
    %c0_36 = arith.constant 0 : index
    %c0_37 = arith.constant 0 : index
    %39 = vector.load %arg5[%c0_35, %c0_36, %c0_37] : memref<3x96x112xf32, #tpu.memory_space<vmem>>, vector<1x96x112xf32>
    %40 = vector.shape_cast %39 : vector<1x96x112xf32> to vector<96x112xf32>
    %cst_38 = arith.constant dense<0.000000e+00> : vector<6x112xf32>
    %41 = tpu.matmul %38, %40, %cst_38 {dimension_numbers = #tpu.dot_dimension_numbers<[1], [0], [0], [1], [0, 0, 1, 1], [], []>} : vector<6x96xf32>, vector<96x112xf32>, vector<6x112xf32> -> vector<6x112xf32>
    %c0_39 = arith.constant 0 : index
    %c0_40 = arith.constant 0 : index
    %c0_41 = arith.constant 0 : index
    %42 = vector.load %arg6[%c0_39, %c0_40, %c0_41] : memref<3x14x6xf32, #tpu.memory_space<vmem>>, vector<1x14x6xf32>
    %43 = vector.shape_cast %42 : vector<1x14x6xf32> to vector<14x6xf32>
    %cst_42 = arith.constant dense<0.000000e+00> : vector<14x112xf32>
    %44 = tpu.matmul %43, %41, %cst_42 {dimension_numbers = #tpu.dot_dimension_numbers<[1], [0], [0], [1], [0, 0, 1, 1], [], []>} : vector<14x6xf32>, vector<6x112xf32>, vector<14x112xf32> -> vector<14x112xf32>
    %c1_43 = arith.constant 1 : index
    %c0_44 = arith.constant 0 : index
    %c0_45 = arith.constant 0 : index
    %45 = vector.load %arg5[%c1_43, %c0_44, %c0_45] : memref<3x96x112xf32, #tpu.memory_space<vmem>>, vector<1x96x112xf32>
    %46 = vector.shape_cast %45 : vector<1x96x112xf32> to vector<96x112xf32>
    %cst_46 = arith.constant dense<0.000000e+00> : vector<6x112xf32>
    %47 = tpu.matmul %38, %46, %cst_46 {dimension_numbers = #tpu.dot_dimension_numbers<[1], [0], [0], [1], [0, 0, 1, 1], [], []>} : vector<6x96xf32>, vector<96x112xf32>, vector<6x112xf32> -> vector<6x112xf32>
    %c1_47 = arith.constant 1 : index
    %c0_48 = arith.constant 0 : index
    %c0_49 = arith.constant 0 : index
    %48 = vector.load %arg6[%c1_47, %c0_48, %c0_49] : memref<3x14x6xf32, #tpu.memory_space<vmem>>, vector<1x14x6xf32>
    %49 = vector.shape_cast %48 : vector<1x14x6xf32> to vector<14x6xf32>
    %cst_50 = arith.constant dense<0.000000e+00> : vector<14x112xf32>
    %50 = tpu.matmul %49, %47, %cst_50 {dimension_numbers = #tpu.dot_dimension_numbers<[1], [0], [0], [1], [0, 0, 1, 1], [], []>} : vector<14x6xf32>, vector<6x112xf32>, vector<14x112xf32> -> vector<14x112xf32>
    %51 = arith.addf %44, %50 : vector<14x112xf32>
    %c2_51 = arith.constant 2 : index
    %c0_52 = arith.constant 0 : index
    %c0_53 = arith.constant 0 : index
    %52 = vector.load %arg5[%c2_51, %c0_52, %c0_53] : memref<3x96x112xf32, #tpu.memory_space<vmem>>, vector<1x96x112xf32>
    %53 = vector.shape_cast %52 : vector<1x96x112xf32> to vector<96x112xf32>
    %cst_54 = arith.constant dense<0.000000e+00> : vector<6x112xf32>
    %54 = tpu.matmul %38, %53, %cst_54 {dimension_numbers = #tpu.dot_dimension_numbers<[1], [0], [0], [1], [0, 0, 1, 1], [], []>} : vector<6x96xf32>, vector<96x112xf32>, vector<6x112xf32> -> vector<6x112xf32>
    %c2_55 = arith.constant 2 : index
    %c0_56 = arith.constant 0 : index
    %c0_57 = arith.constant 0 : index
    %55 = vector.load %arg6[%c2_55, %c0_56, %c0_57] : memref<3x14x6xf32, #tpu.memory_space<vmem>>, vector<1x14x6xf32>
    %56 = vector.shape_cast %55 : vector<1x14x6xf32> to vector<14x6xf32>
    %cst_58 = arith.constant dense<0.000000e+00> : vector<14x112xf32>
    %57 = tpu.matmul %56, %54, %cst_58 {dimension_numbers = #tpu.dot_dimension_numbers<[1], [0], [0], [1], [0, 0, 1, 1], [], []>} : vector<14x6xf32>, vector<6x112xf32>, vector<14x112xf32> -> vector<14x112xf32>
    %58 = arith.addf %51, %57 : vector<14x112xf32>
    %c0_59 = arith.constant 0 : index
    %c0_60 = arith.constant 0 : index
    %59 = vector.load %arg7[%c0_59, %c0_60] : memref<1x112xf32, #tpu.memory_space<vmem>>, vector<1x112xf32>
    %60 = vector.broadcast %59 : vector<1x112xf32> to vector<14x112xf32>
    %61 = arith.addf %58, %60 : vector<14x112xf32>
    %cst_61 = arith.constant dense<0.000000e+00> : vector<112xf32>
    %62 = vector.multi_reduction <add>, %61, %cst_61 [0] : vector<14x112xf32> to vector<112xf32>
    %63 = vector.shape_cast %62 : vector<112xf32> to vector<1x112xf32>
    %64 = arith.mulf %61, %61 : vector<14x112xf32>
    %cst_62 = arith.constant dense<0.000000e+00> : vector<112xf32>
    %65 = vector.multi_reduction <add>, %64, %cst_62 [0] : vector<14x112xf32> to vector<112xf32>
    %66 = vector.shape_cast %65 : vector<112xf32> to vector<1x112xf32>
    %67 = tpu.concatenate %63, %66 in 0 : vector<1x112xf32>, vector<1x112xf32> -> vector<2x112xf32>
    %c0_63 = arith.constant 0 : index
    %c0_64 = arith.constant 0 : index
    %68 = vector.load %arg8[%c0_63, %c0_64] : memref<112x16xf32, #tpu.memory_space<vmem>>, vector<112x16xf32>
    %cst_65 = arith.constant dense<0.000000e+00> : vector<2x16xf32>
    %69 = tpu.matmul %67, %68, %cst_65 {dimension_numbers = #tpu.dot_dimension_numbers<[1], [0], [0], [1], [0, 0, 1, 1], [], []>} : vector<2x112xf32>, vector<112x16xf32>, vector<2x16xf32> -> vector<2x16xf32>
    %70 = vector.extract_strided_slice %69 {offsets = [0, 0], sizes = [1, 16], strides = [1, 1]} : vector<2x16xf32> to vector<1x16xf32>
    %cst_66 = arith.constant 9.800000e+01 : f32
    %71 = vector.broadcast %cst_66 : f32 to vector<1x16xf32>
    %72 = arith.divf %70, %71 : vector<1x16xf32>
    %73 = vector.extract_strided_slice %69 {offsets = [1, 0], sizes = [1, 16], strides = [1, 1]} : vector<2x16xf32> to vector<1x16xf32>
    %cst_67 = arith.constant 9.800000e+01 : f32
    %74 = vector.broadcast %cst_67 : f32 to vector<1x16xf32>
    %75 = arith.divf %73, %74 : vector<1x16xf32>
    %76 = arith.mulf %72, %72 : vector<1x16xf32>
    %77 = arith.subf %75, %76 : vector<1x16xf32>
    %cst_68 = arith.constant 0.000000e+00 : f32
    %78 = vector.broadcast %cst_68 : f32 to vector<1x16xf32>
    %79 = arith.maximumf %77, %78 : vector<1x16xf32>
    %cst_69 = arith.constant 9.99999974E-6 : f32
    %80 = vector.broadcast %cst_69 : f32 to vector<1x16xf32>
    %81 = arith.addf %79, %80 : vector<1x16xf32>
    %82 = math.rsqrt %81 : vector<1x16xf32>
    %c0_70 = arith.constant 0 : index
    %c0_71 = arith.constant 0 : index
    %83 = vector.load %arg10[%c0_70, %c0_71] : memref<1x16xf32, #tpu.memory_space<vmem>>, vector<1x16xf32>
    %84 = arith.mulf %83, %82 : vector<1x16xf32>
    %c0_72 = arith.constant 0 : index
    %c0_73 = arith.constant 0 : index
    %85 = vector.load %arg11[%c0_72, %c0_73] : memref<1x16xf32, #tpu.memory_space<vmem>>, vector<1x16xf32>
    %86 = arith.mulf %72, %84 : vector<1x16xf32>
    %87 = arith.subf %85, %86 : vector<1x16xf32>
    %88 = tpu.concatenate %84, %87 in 0 : vector<1x16xf32>, vector<1x16xf32> -> vector<2x16xf32>
    %c0_74 = arith.constant 0 : index
    %c0_75 = arith.constant 0 : index
    %89 = vector.load %arg9[%c0_74, %c0_75] : memref<16x112xf32, #tpu.memory_space<vmem>>, vector<16x112xf32>
    %cst_76 = arith.constant dense<0.000000e+00> : vector<2x112xf32>
    %90 = tpu.matmul %88, %89, %cst_76 {dimension_numbers = #tpu.dot_dimension_numbers<[1], [0], [0], [1], [0, 0, 1, 1], [], []>} : vector<2x16xf32>, vector<16x112xf32>, vector<2x112xf32> -> vector<2x112xf32>
    %91 = vector.extract_strided_slice %90 {offsets = [0, 0], sizes = [1, 112], strides = [1, 1]} : vector<2x112xf32> to vector<1x112xf32>
    %92 = vector.broadcast %91 : vector<1x112xf32> to vector<14x112xf32>
    %93 = arith.mulf %61, %92 : vector<14x112xf32>
    %94 = vector.extract_strided_slice %90 {offsets = [1, 0], sizes = [1, 112], strides = [1, 1]} : vector<2x112xf32> to vector<1x112xf32>
    %95 = vector.broadcast %94 : vector<1x112xf32> to vector<14x112xf32>
    %96 = arith.addf %93, %95 : vector<14x112xf32>
    %cst_77 = arith.constant 0.000000e+00 : f32
    %97 = vector.broadcast %cst_77 : f32 to vector<14x112xf32>
    %98 = arith.maximumf %96, %97 : vector<14x112xf32>
    %c0_78 = arith.constant 0 : index
    %c0_79 = arith.constant 0 : index
    %c0_80 = arith.constant 0 : index
    %99 = vector.load %arg12[%c0_78, %c0_79, %c0_80] : memref<3x112x112xf32, #tpu.memory_space<vmem>>, vector<1x112x112xf32>
    %100 = vector.shape_cast %99 : vector<1x112x112xf32> to vector<112x112xf32>
    %cst_81 = arith.constant dense<0.000000e+00> : vector<14x112xf32>
    %101 = tpu.matmul %98, %100, %cst_81 {dimension_numbers = #tpu.dot_dimension_numbers<[1], [0], [0], [1], [0, 0, 1, 1], [], []>} : vector<14x112xf32>, vector<112x112xf32>, vector<14x112xf32> -> vector<14x112xf32>
    %c0_82 = arith.constant 0 : index
    %c0_83 = arith.constant 0 : index
    %c0_84 = arith.constant 0 : index
    %102 = vector.load %arg13[%c0_82, %c0_83, %c0_84] : memref<3x28x14xf32, #tpu.memory_space<vmem>>, vector<1x28x14xf32>
    %103 = vector.shape_cast %102 : vector<1x28x14xf32> to vector<28x14xf32>
    %cst_85 = arith.constant dense<0.000000e+00> : vector<28x112xf32>
    %104 = tpu.matmul %103, %101, %cst_85 {dimension_numbers = #tpu.dot_dimension_numbers<[1], [0], [0], [1], [0, 0, 1, 1], [], []>} : vector<28x14xf32>, vector<14x112xf32>, vector<28x112xf32> -> vector<28x112xf32>
    %c1_86 = arith.constant 1 : index
    %c0_87 = arith.constant 0 : index
    %c0_88 = arith.constant 0 : index
    %105 = vector.load %arg12[%c1_86, %c0_87, %c0_88] : memref<3x112x112xf32, #tpu.memory_space<vmem>>, vector<1x112x112xf32>
    %106 = vector.shape_cast %105 : vector<1x112x112xf32> to vector<112x112xf32>
    %cst_89 = arith.constant dense<0.000000e+00> : vector<14x112xf32>
    %107 = tpu.matmul %98, %106, %cst_89 {dimension_numbers = #tpu.dot_dimension_numbers<[1], [0], [0], [1], [0, 0, 1, 1], [], []>} : vector<14x112xf32>, vector<112x112xf32>, vector<14x112xf32> -> vector<14x112xf32>
    %c1_90 = arith.constant 1 : index
    %c0_91 = arith.constant 0 : index
    %c0_92 = arith.constant 0 : index
    %108 = vector.load %arg13[%c1_90, %c0_91, %c0_92] : memref<3x28x14xf32, #tpu.memory_space<vmem>>, vector<1x28x14xf32>
    %109 = vector.shape_cast %108 : vector<1x28x14xf32> to vector<28x14xf32>
    %cst_93 = arith.constant dense<0.000000e+00> : vector<28x112xf32>
    %110 = tpu.matmul %109, %107, %cst_93 {dimension_numbers = #tpu.dot_dimension_numbers<[1], [0], [0], [1], [0, 0, 1, 1], [], []>} : vector<28x14xf32>, vector<14x112xf32>, vector<28x112xf32> -> vector<28x112xf32>
    %111 = arith.addf %104, %110 : vector<28x112xf32>
    %c2_94 = arith.constant 2 : index
    %c0_95 = arith.constant 0 : index
    %c0_96 = arith.constant 0 : index
    %112 = vector.load %arg12[%c2_94, %c0_95, %c0_96] : memref<3x112x112xf32, #tpu.memory_space<vmem>>, vector<1x112x112xf32>
    %113 = vector.shape_cast %112 : vector<1x112x112xf32> to vector<112x112xf32>
    %cst_97 = arith.constant dense<0.000000e+00> : vector<14x112xf32>
    %114 = tpu.matmul %98, %113, %cst_97 {dimension_numbers = #tpu.dot_dimension_numbers<[1], [0], [0], [1], [0, 0, 1, 1], [], []>} : vector<14x112xf32>, vector<112x112xf32>, vector<14x112xf32> -> vector<14x112xf32>
    %c2_98 = arith.constant 2 : index
    %c0_99 = arith.constant 0 : index
    %c0_100 = arith.constant 0 : index
    %115 = vector.load %arg13[%c2_98, %c0_99, %c0_100] : memref<3x28x14xf32, #tpu.memory_space<vmem>>, vector<1x28x14xf32>
    %116 = vector.shape_cast %115 : vector<1x28x14xf32> to vector<28x14xf32>
    %cst_101 = arith.constant dense<0.000000e+00> : vector<28x112xf32>
    %117 = tpu.matmul %116, %114, %cst_101 {dimension_numbers = #tpu.dot_dimension_numbers<[1], [0], [0], [1], [0, 0, 1, 1], [], []>} : vector<28x14xf32>, vector<14x112xf32>, vector<28x112xf32> -> vector<28x112xf32>
    %118 = arith.addf %111, %117 : vector<28x112xf32>
    %c0_102 = arith.constant 0 : index
    %c0_103 = arith.constant 0 : index
    %119 = vector.load %arg14[%c0_102, %c0_103] : memref<1x112xf32, #tpu.memory_space<vmem>>, vector<1x112xf32>
    %120 = vector.broadcast %119 : vector<1x112xf32> to vector<28x112xf32>
    %121 = arith.addf %118, %120 : vector<28x112xf32>
    %cst_104 = arith.constant dense<0.000000e+00> : vector<112xf32>
    %122 = vector.multi_reduction <add>, %121, %cst_104 [0] : vector<28x112xf32> to vector<112xf32>
    %123 = vector.shape_cast %122 : vector<112xf32> to vector<1x112xf32>
    %124 = arith.mulf %121, %121 : vector<28x112xf32>
    %cst_105 = arith.constant dense<0.000000e+00> : vector<112xf32>
    %125 = vector.multi_reduction <add>, %124, %cst_105 [0] : vector<28x112xf32> to vector<112xf32>
    %126 = vector.shape_cast %125 : vector<112xf32> to vector<1x112xf32>
    %127 = tpu.concatenate %123, %126 in 0 : vector<1x112xf32>, vector<1x112xf32> -> vector<2x112xf32>
    %c0_106 = arith.constant 0 : index
    %c0_107 = arith.constant 0 : index
    %128 = vector.load %arg15[%c0_106, %c0_107] : memref<112x8xf32, #tpu.memory_space<vmem>>, vector<112x8xf32>
    %cst_108 = arith.constant dense<0.000000e+00> : vector<2x8xf32>
    %129 = tpu.matmul %127, %128, %cst_108 {dimension_numbers = #tpu.dot_dimension_numbers<[1], [0], [0], [1], [0, 0, 1, 1], [], []>} : vector<2x112xf32>, vector<112x8xf32>, vector<2x8xf32> -> vector<2x8xf32>
    %130 = vector.extract_strided_slice %129 {offsets = [0, 0], sizes = [1, 8], strides = [1, 1]} : vector<2x8xf32> to vector<1x8xf32>
    %cst_109 = arith.constant 3.920000e+02 : f32
    %131 = vector.broadcast %cst_109 : f32 to vector<1x8xf32>
    %132 = arith.divf %130, %131 : vector<1x8xf32>
    %133 = vector.extract_strided_slice %129 {offsets = [1, 0], sizes = [1, 8], strides = [1, 1]} : vector<2x8xf32> to vector<1x8xf32>
    %cst_110 = arith.constant 3.920000e+02 : f32
    %134 = vector.broadcast %cst_110 : f32 to vector<1x8xf32>
    %135 = arith.divf %133, %134 : vector<1x8xf32>
    %136 = arith.mulf %132, %132 : vector<1x8xf32>
    %137 = arith.subf %135, %136 : vector<1x8xf32>
    %cst_111 = arith.constant 0.000000e+00 : f32
    %138 = vector.broadcast %cst_111 : f32 to vector<1x8xf32>
    %139 = arith.maximumf %137, %138 : vector<1x8xf32>
    %cst_112 = arith.constant 9.99999974E-6 : f32
    %140 = vector.broadcast %cst_112 : f32 to vector<1x8xf32>
    %141 = arith.addf %139, %140 : vector<1x8xf32>
    %142 = math.rsqrt %141 : vector<1x8xf32>
    %c0_113 = arith.constant 0 : index
    %c0_114 = arith.constant 0 : index
    %143 = vector.load %arg17[%c0_113, %c0_114] : memref<1x8xf32, #tpu.memory_space<vmem>>, vector<1x8xf32>
    %144 = arith.mulf %143, %142 : vector<1x8xf32>
    %c0_115 = arith.constant 0 : index
    %c0_116 = arith.constant 0 : index
    %145 = vector.load %arg18[%c0_115, %c0_116] : memref<1x8xf32, #tpu.memory_space<vmem>>, vector<1x8xf32>
    %146 = arith.mulf %132, %144 : vector<1x8xf32>
    %147 = arith.subf %145, %146 : vector<1x8xf32>
    %148 = tpu.concatenate %144, %147 in 0 : vector<1x8xf32>, vector<1x8xf32> -> vector<2x8xf32>
    %c0_117 = arith.constant 0 : index
    %c0_118 = arith.constant 0 : index
    %149 = vector.load %arg16[%c0_117, %c0_118] : memref<8x112xf32, #tpu.memory_space<vmem>>, vector<8x112xf32>
    %cst_119 = arith.constant dense<0.000000e+00> : vector<2x112xf32>
    %150 = tpu.matmul %148, %149, %cst_119 {dimension_numbers = #tpu.dot_dimension_numbers<[1], [0], [0], [1], [0, 0, 1, 1], [], []>} : vector<2x8xf32>, vector<8x112xf32>, vector<2x112xf32> -> vector<2x112xf32>
    %151 = vector.extract_strided_slice %150 {offsets = [0, 0], sizes = [1, 112], strides = [1, 1]} : vector<2x112xf32> to vector<1x112xf32>
    %152 = vector.broadcast %151 : vector<1x112xf32> to vector<28x112xf32>
    %153 = arith.mulf %121, %152 : vector<28x112xf32>
    %154 = vector.extract_strided_slice %150 {offsets = [1, 0], sizes = [1, 112], strides = [1, 1]} : vector<2x112xf32> to vector<1x112xf32>
    %155 = vector.broadcast %154 : vector<1x112xf32> to vector<28x112xf32>
    %156 = arith.addf %153, %155 : vector<28x112xf32>
    %cst_120 = arith.constant 0.000000e+00 : f32
    %157 = vector.broadcast %cst_120 : f32 to vector<28x112xf32>
    %158 = arith.maximumf %156, %157 : vector<28x112xf32>
    %c0_121 = arith.constant 0 : index
    %c0_122 = arith.constant 0 : index
    %c0_123 = arith.constant 0 : index
    %159 = vector.load %arg19[%c0_121, %c0_122, %c0_123] : memref<3x112x28xf32, #tpu.memory_space<vmem>>, vector<1x112x28xf32>
    %160 = vector.shape_cast %159 : vector<1x112x28xf32> to vector<112x28xf32>
    %cst_124 = arith.constant dense<0.000000e+00> : vector<28x28xf32>
    %161 = tpu.matmul %158, %160, %cst_124 {dimension_numbers = #tpu.dot_dimension_numbers<[1], [0], [0], [1], [0, 0, 1, 1], [], []>} : vector<28x112xf32>, vector<112x28xf32>, vector<28x28xf32> -> vector<28x28xf32>
    %c0_125 = arith.constant 0 : index
    %c0_126 = arith.constant 0 : index
    %c0_127 = arith.constant 0 : index
    %162 = vector.load %arg20[%c0_125, %c0_126, %c0_127] : memref<3x56x28xf32, #tpu.memory_space<vmem>>, vector<1x56x28xf32>
    %163 = vector.shape_cast %162 : vector<1x56x28xf32> to vector<56x28xf32>
    %cst_128 = arith.constant dense<0.000000e+00> : vector<56x28xf32>
    %164 = tpu.matmul %163, %161, %cst_128 {dimension_numbers = #tpu.dot_dimension_numbers<[1], [0], [0], [1], [0, 0, 1, 1], [], []>} : vector<56x28xf32>, vector<28x28xf32>, vector<56x28xf32> -> vector<56x28xf32>
    %c1_129 = arith.constant 1 : index
    %c0_130 = arith.constant 0 : index
    %c0_131 = arith.constant 0 : index
    %165 = vector.load %arg19[%c1_129, %c0_130, %c0_131] : memref<3x112x28xf32, #tpu.memory_space<vmem>>, vector<1x112x28xf32>
    %166 = vector.shape_cast %165 : vector<1x112x28xf32> to vector<112x28xf32>
    %cst_132 = arith.constant dense<0.000000e+00> : vector<28x28xf32>
    %167 = tpu.matmul %158, %166, %cst_132 {dimension_numbers = #tpu.dot_dimension_numbers<[1], [0], [0], [1], [0, 0, 1, 1], [], []>} : vector<28x112xf32>, vector<112x28xf32>, vector<28x28xf32> -> vector<28x28xf32>
    %c1_133 = arith.constant 1 : index
    %c0_134 = arith.constant 0 : index
    %c0_135 = arith.constant 0 : index
    %168 = vector.load %arg20[%c1_133, %c0_134, %c0_135] : memref<3x56x28xf32, #tpu.memory_space<vmem>>, vector<1x56x28xf32>
    %169 = vector.shape_cast %168 : vector<1x56x28xf32> to vector<56x28xf32>
    %cst_136 = arith.constant dense<0.000000e+00> : vector<56x28xf32>
    %170 = tpu.matmul %169, %167, %cst_136 {dimension_numbers = #tpu.dot_dimension_numbers<[1], [0], [0], [1], [0, 0, 1, 1], [], []>} : vector<56x28xf32>, vector<28x28xf32>, vector<56x28xf32> -> vector<56x28xf32>
    %171 = arith.addf %164, %170 : vector<56x28xf32>
    %c2_137 = arith.constant 2 : index
    %c0_138 = arith.constant 0 : index
    %c0_139 = arith.constant 0 : index
    %172 = vector.load %arg19[%c2_137, %c0_138, %c0_139] : memref<3x112x28xf32, #tpu.memory_space<vmem>>, vector<1x112x28xf32>
    %173 = vector.shape_cast %172 : vector<1x112x28xf32> to vector<112x28xf32>
    %cst_140 = arith.constant dense<0.000000e+00> : vector<28x28xf32>
    %174 = tpu.matmul %158, %173, %cst_140 {dimension_numbers = #tpu.dot_dimension_numbers<[1], [0], [0], [1], [0, 0, 1, 1], [], []>} : vector<28x112xf32>, vector<112x28xf32>, vector<28x28xf32> -> vector<28x28xf32>
    %c2_141 = arith.constant 2 : index
    %c0_142 = arith.constant 0 : index
    %c0_143 = arith.constant 0 : index
    %175 = vector.load %arg20[%c2_141, %c0_142, %c0_143] : memref<3x56x28xf32, #tpu.memory_space<vmem>>, vector<1x56x28xf32>
    %176 = vector.shape_cast %175 : vector<1x56x28xf32> to vector<56x28xf32>
    %cst_144 = arith.constant dense<0.000000e+00> : vector<56x28xf32>
    %177 = tpu.matmul %176, %174, %cst_144 {dimension_numbers = #tpu.dot_dimension_numbers<[1], [0], [0], [1], [0, 0, 1, 1], [], []>} : vector<56x28xf32>, vector<28x28xf32>, vector<56x28xf32> -> vector<56x28xf32>
    %178 = arith.addf %171, %177 : vector<56x28xf32>
    %c0_145 = arith.constant 0 : index
    %c0_146 = arith.constant 0 : index
    %179 = vector.load %arg21[%c0_145, %c0_146] : memref<1x28xf32, #tpu.memory_space<vmem>>, vector<1x28xf32>
    %180 = vector.broadcast %179 : vector<1x28xf32> to vector<56x28xf32>
    %181 = arith.addf %178, %180 : vector<56x28xf32>
    %182 = arith.negf %181 : vector<56x28xf32>
    %183 = math.exp %182 : vector<56x28xf32>
    %cst_147 = arith.constant 1.000000e+00 : f32
    %184 = vector.broadcast %cst_147 : f32 to vector<56x28xf32>
    %185 = arith.addf %184, %183 : vector<56x28xf32>
    %186 = arith.divf %184, %185 : vector<56x28xf32>
    %c0_148 = arith.constant 0 : index
    %c0_149 = arith.constant 0 : index
    %187 = vector.load %arg22[%c0_148, %c0_149] : memref<56x28xf32, #tpu.memory_space<vmem>>, vector<56x28xf32>
    tpu.vector_store %arg22[%c0_148, %c0_149], %186 {strides = array<i32>} : memref<56x28xf32, #tpu.memory_space<vmem>>, vector<56x28xf32>,
    return
  }
}

</mosaic_0001>

<llo_original>
// kernel: decoder_forward.1
$region0: #{decoder_forward.1}
  #allocation0 [shape = 'u32[]', space=smem, size = 0x4, offset = 0x4, fixed_abs, tag = 'smem constant byte address 0x4 - core index']
  #allocation1 [shape = 'u32[72,128]{1,0:T(1,128)}', space=vmem, size = 0x9000, scoped, tag = 'internal scratch']
  #allocation2 [shape = 'f32[6,96]{1,0:T(8,128)}', space=vmem, size = 0x1000, scoped, tag = 'scratch operand']
  %s0 = inlined_call_operand.vmem [shape: f32[2,4], index: 0, kind: input, shape index: {}]
  %s1 = inlined_call_operand.vmem [shape: f32[4,128], index: 1, kind: input, shape index: {}]
  %s2 = inlined_call_operand.vmem [shape: f32[1,128], index: 2, kind: input, shape index: {}]
  %s3 = inlined_call_operand.vmem [shape: f32[3,128,96], index: 3, kind: input, shape index: {}]
  %s4 = inlined_call_operand.vmem [shape: f32[3,1,96], index: 4, kind: input, shape index: {}]
  %s5 = inlined_call_operand.vmem [shape: f32[3,96,112], index: 5, kind: input, shape index: {}]
  %s6 = inlined_call_operand.vmem [shape: f32[3,14,6], index: 6, kind: input, shape index: {}]
  %s7 = inlined_call_operand.vmem [shape: f32[1,112], index: 7, kind: input, shape index: {}]
  %s8 = inlined_call_operand.vmem [shape: f32[112,16], index: 8, kind: input, shape index: {}]
  %s9 = inlined_call_operand.vmem [shape: f32[16,112], index: 9, kind: input, shape index: {}]
  %s10 = inlined_call_operand.vmem [shape: f32[1,16], index: 10, kind: input, shape index: {}]
  %s11 = inlined_call_operand.vmem [shape: f32[1,16], index: 11, kind: input, shape index: {}]
  %s12 = inlined_call_operand.vmem [shape: f32[3,112,112], index: 12, kind: input, shape index: {}]
  %s13 = inlined_call_operand.vmem [shape: f32[3,28,14], index: 13, kind: input, shape index: {}]
  %s14 = inlined_call_operand.vmem [shape: f32[1,112], index: 14, kind: input, shape index: {}]
  %s15 = inlined_call_operand.vmem [shape: f32[112,8], index: 15, kind: input, shape index: {}]
  %s16 = inlined_call_operand.vmem [shape: f32[8,112], index: 16, kind: input, shape index: {}]
  %s17 = inlined_call_operand.vmem [shape: f32[1,8], index: 17, kind: input, shape index: {}]
  %s18 = inlined_call_operand.vmem [shape: f32[1,8], index: 18, kind: input, shape index: {}]
  %s19 = inlined_call_operand.vmem [shape: f32[3,112,28], index: 19, kind: input, shape index: {}]
  %s20 = inlined_call_operand.vmem [shape: f32[3,56,28], index: 20, kind: input, shape index: {}]
  %s21 = inlined_call_operand.vmem [shape: f32[1,28], index: 21, kind: input, shape index: {}]
  %s22 = inlined_call_operand.hbm [shape: f32[56,28], index: 22, kind: output, shape index: {}]
  %s23 = sld [smem:[#allocation0]]
  $region98: #{decoder_forward.1} parent=0
    _
  %s25 = ssub.s32 1, %s23
  %s26 = scalar_select 0, %s25, %s23
  $region1: #{decoder_forward.1} parent=0
    #allocation3 [shape = 'u8[28672]{0}', space=vmem, size = 0x7000, scoped, tag = 'output window, operand 0, single buffered']
    #allocation4 [shape = 's32[1]{0}', space=sflag, size = 0x4, scoped, tag = 'scoped memory for decoder_forward.1']
    %27 = vsyncpa [#allocation4], 0
    // Predicated region
    $region2: #{decoder_forward.1} parent=1 // pred_check
      _
    $region3: #{decoder_forward.1} parent=1 // pred_check_branch
      %29 = sbr.rel (0) target = $region5
    $region4: #{decoder_forward.1} parent=1 // pred_region
      _
    $region5: #{decoder_forward.1} parent=1 // pred_fallthru
      _
    // Predicated region
    $region6: #{decoder_forward.1} parent=1 // pred_check
      _
    $region7: #{decoder_forward.1} parent=1 // pred_check_branch
      %31 = sbr.rel (0) target = $region9
    $region8: #{decoder_forward.1} parent=1 // pred_region
      _
    $region9: #{decoder_forward.1} parent=1 // pred_fallthru
      _
    // Predicated region
    $region10: #{decoder_forward.1} parent=1 // pred_check
      _
    $region11: #{decoder_forward.1} parent=1 // pred_check_branch
      %33 = sbr.rel (0) target = $region13
    $region12: #{decoder_forward.1} parent=1 // pred_region
      _
    $region13: #{decoder_forward.1} parent=1 // pred_fallthru
      _
    // Predicated region
    $region14: #{decoder_forward.1} parent=1 // pred_check
      _
    $region15: #{decoder_forward.1} parent=1 // pred_check_branch
      %35 = sbr.rel (0) target = $region17
    $region16: #{decoder_forward.1} parent=1 // pred_region
      _
    $region17: #{decoder_forward.1} parent=1 // pred_fallthru
      _
    // Predicated region
    $region18: #{decoder_forward.1} parent=1 // pred_check
      _
    $region19: #{decoder_forward.1} parent=1 // pred_check_branch
      %37 = sbr.rel (0) target = $region21
    $region20: #{decoder_forward.1} parent=1 // pred_region
      _
    $region21: #{decoder_forward.1} parent=1 // pred_fallthru
      _
    // Predicated region
    $region22: #{decoder_forward.1} parent=1 // pred_check
      _
    $region23: #{decoder_forward.1} parent=1 // pred_check_branch
      %39 = sbr.rel (0) target = $region25
    $region24: #{decoder_forward.1} parent=1 // pred_region
      _
    $region25: #{decoder_forward.1} parent=1 // pred_fallthru
      _
    // Predicated region
    $region26: #{decoder_forward.1} parent=1 // pred_check
      _
    $region27: #{decoder_forward.1} parent=1 // pred_check_branch
      %41 = sbr.rel (0) target = $region29
    $region28: #{decoder_forward.1} parent=1 // pred_region
      _
    $region29: #{decoder_forward.1} parent=1 // pred_fallthru
      _
    // Predicated region
    $region30: #{decoder_forward.1} parent=1 // pred_check
      _
    $region31: #{decoder_forward.1} parent=1 // pred_check_branch
      %43 = sbr.rel (0) target = $region33
    $region32: #{decoder_forward.1} parent=1 // pred_region
      _
    $region33: #{decoder_forward.1} parent=1 // pred_fallthru
      _
    // Predicated region
    $region34: #{decoder_forward.1} parent=1 // pred_check
      _
    $region35: #{decoder_forward.1} parent=1 // pred_check_branch
      %45 = sbr.rel (0) target = $region37
    $region36: #{decoder_forward.1} parent=1 // pred_region
      _
    $region37: #{decoder_forward.1} parent=1 // pred_fallthru
      _
    // Predicated region
    $region38: #{decoder_forward.1} parent=1 // pred_check
      _
    $region39: #{decoder_forward.1} parent=1 // pred_check_branch
      %47 = sbr.rel (0) target = $region41
    $region40: #{decoder_forward.1} parent=1 // pred_region
      _
    $region41: #{decoder_forward.1} parent=1 // pred_fallthru
      _
    // Predicated region
    $region42: #{decoder_forward.1} parent=1 // pred_check
      _
    $region43: #{decoder_forward.1} parent=1 // pred_check_branch
      %49 = sbr.rel (0) target = $region45
    $region44: #{decoder_forward.1} parent=1 // pred_region
      _
    $region45: #{decoder_forward.1} parent=1 // pred_fallthru
      _
    // Predicated region
    $region46: #{decoder_forward.1} parent=1 // pred_check
      _
    $region47: #{decoder_forward.1} parent=1 // pred_check_branch
      %51 = sbr.rel (0) target = $region49
    $region48: #{decoder_forward.1} parent=1 // pred_region
      _
    $region49: #{decoder_forward.1} parent=1 // pred_fallthru
      _
    // Predicated region
    $region50: #{decoder_forward.1} parent=1 // pred_check
      _
    $region51: #{decoder_forward.1} parent=1 // pred_check_branch
      %53 = sbr.rel (0) target = $region53
    $region52: #{decoder_forward.1} parent=1 // pred_region
      _
    $region53: #{decoder_forward.1} parent=1 // pred_fallthru
      _
    // Predicated region
    $region54: #{decoder_forward.1} parent=1 // pred_check
      _
    $region55: #{decoder_forward.1} parent=1 // pred_check_branch
      %55 = sbr.rel (0) target = $region57
    $region56: #{decoder_forward.1} parent=1 // pred_region
      _
    $region57: #{decoder_forward.1} parent=1 // pred_fallthru
      _
    // Predicated region
    $region58: #{decoder_forward.1} parent=1 // pred_check
      _
    $region59: #{decoder_forward.1} parent=1 // pred_check_branch
      %57 = sbr.rel (0) target = $region61
    $region60: #{decoder_forward.1} parent=1 // pred_region
      _
    $region61: #{decoder_forward.1} parent=1 // pred_fallthru
      _
    // Predicated region
    $region62: #{decoder_forward.1} parent=1 // pred_check
      _
    $region63: #{decoder_forward.1} parent=1 // pred_check_branch
      %59 = sbr.rel (0) target = $region65
    $region64: #{decoder_forward.1} parent=1 // pred_region
      _
    $region65: #{decoder_forward.1} parent=1 // pred_fallthru
      _
    // Predicated region
    $region66: #{decoder_forward.1} parent=1 // pred_check
      _
    $region67: #{decoder_forward.1} parent=1 // pred_check_branch
      %61 = sbr.rel (0) target = $region69
    $region68: #{decoder_forward.1} parent=1 // pred_region
      _
    $region69: #{decoder_forward.1} parent=1 // pred_fallthru
      _
    // Predicated region
    $region70: #{decoder_forward.1} parent=1 // pred_check
      _
    $region71: #{decoder_forward.1} parent=1 // pred_check_branch
      %63 = sbr.rel (0) target = $region73
    $region72: #{decoder_forward.1} parent=1 // pred_region
      _
    $region73: #{decoder_forward.1} parent=1 // pred_fallthru
      _
    // Predicated region
    $region74: #{decoder_forward.1} parent=1 // pred_check
      _
    $region75: #{decoder_forward.1} parent=1 // pred_check_branch
      %65 = sbr.rel (0) target = $region77
    $region76: #{decoder_forward.1} parent=1 // pred_region
      _
    $region77: #{decoder_forward.1} parent=1 // pred_fallthru
      _
    // Predicated region
    $region78: #{decoder_forward.1} parent=1 // pred_check
      _
    $region79: #{decoder_forward.1} parent=1 // pred_check_branch
      %67 = sbr.rel (0) target = $region81
    $region80: #{decoder_forward.1} parent=1 // pred_region
      _
    $region81: #{decoder_forward.1} parent=1 // pred_fallthru
      _
    // Predicated region
    $region82: #{decoder_forward.1} parent=1 // pred_check
      _
    $region83: #{decoder_forward.1} parent=1 // pred_check_branch
      %69 = sbr.rel (0) target = $region85
    $region84: #{decoder_forward.1} parent=1 // pred_region
      _
    $region85: #{decoder_forward.1} parent=1 // pred_fallthru
      _
    // Predicated region
    $region86: #{decoder_forward.1} parent=1 // pred_check
      _
    $region87: #{decoder_forward.1} parent=1 // pred_check_branch
      %71 = sbr.rel (0) target = $region89
    $region88: #{decoder_forward.1} parent=1 // pred_region
      _
    $region89: #{decoder_forward.1} parent=1 // pred_fallthru
      _
    %v72 = vld [vmem:[%s0] sm:$0x3]
    %v73 = vld [vmem:[%s1] sm:$0xf]
    %v74 = vld [vmem:[%s2] sm:$0x1]
    %v76 = vperm.slane %v74, 0
    %vm78 = vcmask 31744
    %v80 = vsel %vm78, %v72, 0
    %vm82 = vcmask 1043456
    %v84 = vsel %vm82, %v73, 0
    %86 = vmatpush.msra.mxu0 0.0
    %87 = vmatpush.msra.mxu0 0.0
    %88 = vmatpush.msra.mxu0 0.0
    %89 = vmatpush.msra.mxu0 0.0
    %90 = vmatpush.msra.mxu0 0.0
    %91 = vmatpush.msra.mxu0 0.0
    %92 = vmatpush.msra.mxu0 0.0
    %93 = vmatpush.msra.mxu0 0.0
    %94 = vmatpush.msra.mxu0 0.0
    %95 = vmatpush.msra.mxu0 0.0
    %96 = vmatpush.msra.mxu0 0.0
    %97 = vmatpush.msra.mxu0 0.0
    %98 = vmatpush.msra.mxu0 0.0
    %99 = vmatpush.msra.mxu0 0.0
    %100 = vmatpush.msra.mxu0 0.0
    %101 = vmatpush.msra.mxu0 %v84
    %102 = vmatmul.f32.gmra.mxu0 %v80
    %v103 = vpop.f32.mrf.mxu0
    %v104 = vadd.f32 %v76, %v103
    %105 = vdwg.mxu0
    %v106 = vmax.f32 %v104, 0.0
    %v107 = vld [vmem:[%s3] sm:$0xff]
    %v108 = vld [vmem:[%s3 + $0x8] sm:$0xff]
    %v109 = vld [vmem:[%s3 + $0x10] sm:$0xff]
    %v110 = vld [vmem:[%s3 + $0x18] sm:$0xff]
    %v111 = vld [vmem:[%s3 + $0x20] sm:$0xff]
    %v112 = vld [vmem:[%s3 + $0x28] sm:$0xff]
    %v113 = vld [vmem:[%s3 + $0x30] sm:$0xff]
    %v114 = vld [vmem:[%s3 + $0x38] sm:$0xff]
    %v115 = vld [vmem:[%s3 + $0x40] sm:$0xff]
    %v116 = vld [vmem:[%s3 + $0x48] sm:$0xff]
    %v117 = vld [vmem:[%s3 + $0x50] sm:$0xff]
    %v118 = vld [vmem:[%s3 + $0x58] sm:$0xff]
    %v119 = vld [vmem:[%s3 + $0x60] sm:$0xff]
    %v120 = vld [vmem:[%s3 + $0x68] sm:$0xff]
    %v121 = vld [vmem:[%s3 + $0x70] sm:$0xff]
    %v122 = vld [vmem:[%s3 + $0x78] sm:$0xff]
    %v123 = vld [vmem:[%s4] sm:$0x1]
    %v125 = vperm.slane %v123, 0
    %127 = vmatpush.msra.mxu0 %v122
    %128 = vmatpush.msra.mxu0 %v121
    %129 = vmatpush.msra.mxu0 %v120
    %130 = vmatpush.msra.mxu0 %v119
    %131 = vmatpush.msra.mxu0 %v118
    %132 = vmatpush.msra.mxu0 %v117
    %133 = vmatpush.msra.mxu0 %v116
    %134 = vmatpush.msra.mxu0 %v115
    %135 = vmatpush.msra.mxu0 %v114
    %136 = vmatpush.msra.mxu0 %v113
    %137 = vmatpush.msra.mxu0 %v112
    %138 = vmatpush.msra.mxu0 %v111
    %139 = vmatpush.msra.mxu0 %v110
    %140 = vmatpush.msra.mxu0 %v109
    %141 = vmatpush.msra.mxu0 %v108
    %142 = vmatpush.msra.mxu0 %v107
    %143 = vmatmul.f32.gmra.mxu0 %v106
    %v144 = vpop.f32.mrf.mxu0
    %v145 = vadd.f32 %v125, %v144
    %146 = vdwg.mxu0
    %v147 = vmax.f32 %v145, 0.0
    %vm148 = vcmask 779264
    %149 = vst.msk [vmem:[#allocation2] sm:$0x3] %vm148, %v147
    %s150 = scalar_lea.vmem %s3, 128
    %v151 = vld [vmem:[%s150] sm:$0xff]
    %v152 = vld [vmem:[%s150 + $0x8] sm:$0xff]
    %v153 = vld [vmem:[%s150 + $0x10] sm:$0xff]
    %v154 = vld [vmem:[%s150 + $0x18] sm:$0xff]
    %v155 = vld [vmem:[%s150 + $0x20] sm:$0xff]
    %v156 = vld [vmem:[%s150 + $0x28] sm:$0xff]
    %v157 = vld [vmem:[%s150 + $0x30] sm:$0xff]
    %v158 = vld [vmem:[%s150 + $0x38] sm:$0xff]
    %v159 = vld [vmem:[%s150 + $0x40] sm:$0xff]
    %v160 = vld [vmem:[%s150 + $0x48] sm:$0xff]
    %v161 = vld [vmem:[%s150 + $0x50] sm:$0xff]
    %v162 = vld [vmem:[%s150 + $0x58] sm:$0xff]
    %v163 = vld [vmem:[%s150 + $0x60] sm:$0xff]
    %v164 = vld [vmem:[%s150 + $0x68] sm:$0xff]
    %v165 = vld [vmem:[%s150 + $0x70] sm:$0xff]
    %v166 = vld [vmem:[%s150 + $0x78] sm:$0xff]
    %s167 = scalar_lea.vmem %s4, 1
    %v168 = vld [vmem:[%s167] sm:$0x1]
    %v170 = vperm.slane %v168, 0
    %172 = vmatpush.msra.mxu0 %v166
    %173 = vmatpush.msra.mxu0 %v165
    %174 = vmatpush.msra.mxu0 %v164
    %175 = vmatpush.msra.mxu0 %v163
    %176 = vmatpush.msra.mxu0 %v162
    %177 = vmatpush.msra.mxu0 %v161
    %178 = vmatpush.msra.mxu0 %v160
    %179 = vmatpush.msra.mxu0 %v159
    %180 = vmatpush.msra.mxu0 %v158
    %181 = vmatpush.msra.mxu0 %v157
    %182 = vmatpush.msra.mxu0 %v156
    %183 = vmatpush.msra.mxu0 %v155
    %184 = vmatpush.msra.mxu0 %v154
    %185 = vmatpush.msra.mxu0 %v153
    %186 = vmatpush.msra.mxu0 %v152
    %187 = vmatpush.msra.mxu0 %v151
    %188 = vmatmul.f32.gmra.mxu0 %v106
    %v189 = vpop.f32.mrf.mxu0
    %v190 = vadd.f32 %v170, %v189
    %191 = vdwg.mxu0
    %v192 = vmax.f32 %v190, 0.0
    %193 = vst.msk [vmem:[#allocation2 + $0x2] sm:$0x3] %vm148, %v192
    %s194 = scalar_lea.vmem %s3, 256
    %v195 = vld [vmem:[%s194] sm:$0xff]
    %v196 = vld [vmem:[%s194 + $0x8] sm:$0xff]
    %v197 = vld [vmem:[%s194 + $0x10] sm:$0xff]
    %v198 = vld [vmem:[%s194 + $0x18] sm:$0xff]
    %v199 = vld [vmem:[%s194 + $0x20] sm:$0xff]
    %v200 = vld [vmem:[%s194 + $0x28] sm:$0xff]
    %v201 = vld [vmem:[%s194 + $0x30] sm:$0xff]
    %v202 = vld [vmem:[%s194 + $0x38] sm:$0xff]
    %v203 = vld [vmem:[%s194 + $0x40] sm:$0xff]
    %v204 = vld [vmem:[%s194 + $0x48] sm:$0xff]
    %v205 = vld [vmem:[%s194 + $0x50] sm:$0xff]
    %v206 = vld [vmem:[%s194 + $0x58] sm:$0xff]
    %v207 = vld [vmem:[%s194 + $0x60] sm:$0xff]
    %v208 = vld [vmem:[%s194 + $0x68] sm:$0xff]
    %v209 = vld [vmem:[%s194 + $0x70] sm:$0xff]
    %v210 = vld [vmem:[%s194 + $0x78] sm:$0xff]
    %s211 = scalar_lea.vmem %s4, 2
    %v212 = vld [vmem:[%s211] sm:$0x1]
    %v214 = vperm.slane %v212, 0
    %216 = vmatpush.msra.mxu0 %v210
    %217 = vmatpush.msra.mxu0 %v209
    %218 = vmatpush.msra.mxu0 %v208
    %219 = vmatpush.msra.mxu0 %v207
    %220 = vmatpush.msra.mxu0 %v206
    %221 = vmatpush.msra.mxu0 %v205
    %222 = vmatpush.msra.mxu0 %v204
    %223 = vmatpush.msra.mxu0 %v203
    %224 = vmatpush.msra.mxu0 %v202
    %225 = vmatpush.msra.mxu0 %v201
    %226 = vmatpush.msra.mxu0 %v200
    %227 = vmatpush.msra.mxu0 %v199
    %228 = vmatpush.msra.mxu0 %v198
    %229 = vmatpush.msra.mxu0 %v197
    %230 = vmatpush.msra.mxu0 %v196
    %231 = vmatpush.msra.mxu0 %v195
    %232 = vmatmul.f32.gmra.mxu0 %v106
    %v233 = vpop.f32.mrf.mxu0
    %v234 = vadd.f32 %v214, %v233
    %235 = vdwg.mxu0
    %v236 = vmax.f32 %v234, 0.0
    %237 = vst.msk [vmem:[#allocation2 + $0x4] sm:$0x3] %vm148, %v236
    %v238 = vld [vmem:[#allocation2] sm:$0x3f]
    %v239 = vld [vmem:[%s5] sm:$0xff]
    %v240 = vld [vmem:[%s5 + $0x8] sm:$0xff]
    %v241 = vld [vmem:[%s5 + $0x10] sm:$0xff]
    %v242 = vld [vmem:[%s5 + $0x18] sm:$0xff]
    %v243 = vld [vmem:[%s5 + $0x20] sm:$0xff]
    %v244 = vld [vmem:[%s5 + $0x28] sm:$0xff]
    %v245 = vld [vmem:[%s5 + $0x30] sm:$0xff]
    %v246 = vld [vmem:[%s5 + $0x38] sm:$0xff]
    %v247 = vld [vmem:[%s5 + $0x40] sm:$0xff]
    %v248 = vld [vmem:[%s5 + $0x48] sm:$0xff]
    %v249 = vld [vmem:[%s5 + $0x50] sm:$0xff]
    %v250 = vld [vmem:[%s5 + $0x58] sm:$0xff]
    %vm251 = vcmask 785408
    %v253 = vsel %vm251, %v238, 0
    %255 = vmatpush.msra.mxu0 0.0
    %256 = vmatpush.msra.mxu0 0.0
    %257 = vmatpush.msra.mxu0 0.0
    %258 = vmatpush.msra.mxu0 0.0
    %259 = vmatpush.msra.mxu0 %v250
    %260 = vmatpush.msra.mxu0 %v249
    %261 = vmatpush.msra.mxu0 %v248
    %262 = vmatpush.msra.mxu0 %v247
    %263 = vmatpush.msra.mxu0 %v246
    %264 = vmatpush.msra.mxu0 %v245
    %265 = vmatpush.msra.mxu0 %v244
    %266 = vmatpush.msra.mxu0 %v243
    %267 = vmatpush.msra.mxu0 %v242
    %268 = vmatpush.msra.mxu0 %v241
    %269 = vmatpush.msra.mxu0 %v240
    %270 = vmatpush.msra.mxu0 %v239
    %271 = vmatmul.f32.gmra.mxu0 %v253
    %v272 = vpop.f32.mrf.mxu0
    %v273 = vadd.f32 0.0, %v272
    %274 = vdwg.mxu0
    %v275 = vld [vmem:[%s6] sm:$0xff]
    %v276 = vld [vmem:[%s6 + $0x8] sm:$0x3f]
    %s277 = scalar_lea.vmem %s5, 96
    %v278 = vld [vmem:[%s277] sm:$0xff]
    %v279 = vld [vmem:[%s277 + $0x8] sm:$0xff]
    %v280 = vld [vmem:[%s277 + $0x10] sm:$0xff]
    %v281 = vld [vmem:[%s277 + $0x18] sm:$0xff]
    %v282 = vld [vmem:[%s277 + $0x20] sm:$0xff]
    %v283 = vld [vmem:[%s277 + $0x28] sm:$0xff]
    %v284 = vld [vmem:[%s277 + $0x30] sm:$0xff]
    %v285 = vld [vmem:[%s277 + $0x38] sm:$0xff]
    %v286 = vld [vmem:[%s277 + $0x40] sm:$0xff]
    %v287 = vld [vmem:[%s277 + $0x48] sm:$0xff]
    %v288 = vld [vmem:[%s277 + $0x50] sm:$0xff]
    %v289 = vld [vmem:[%s277 + $0x58] sm:$0xff]
    %290 = vmatpush.msra.mxu0 0.0
    %291 = vmatpush.msra.mxu0 0.0
    %292 = vmatpush.msra.mxu0 0.0
    %293 = vmatpush.msra.mxu0 0.0
    %294 = vmatpush.msra.mxu0 %v289
    %295 = vmatpush.msra.mxu0 %v288
    %296 = vmatpush.msra.mxu0 %v287
    %297 = vmatpush.msra.mxu0 %v286
    %298 = vmatpush.msra.mxu0 %v285
    %299 = vmatpush.msra.mxu0 %v284
    %300 = vmatpush.msra.mxu0 %v283
    %301 = vmatpush.msra.mxu0 %v282
    %302 = vmatpush.msra.mxu0 %v281
    %303 = vmatpush.msra.mxu0 %v280
    %304 = vmatpush.msra.mxu0 %v279
    %305 = vmatpush.msra.mxu0 %v278
    %306 = vmatmul.f32.gmra.mxu0 %v253
    %v307 = vpop.f32.mrf.mxu0
    %v308 = vadd.f32 0.0, %v307
    %309 = vdwg.mxu0
    %s310 = scalar_lea.vmem %s6, 16
    %v311 = vld [vmem:[%s310] sm:$0xff]
    %v312 = vld [vmem:[%s310 + $0x8] sm:$0x3f]
    %vm313 = vcmask 48128
    %v315 = vsel %vm313, %v311, 0
    %v318 = vsel %vm313, %v312, 0
    %vm320 = vcmask 1045504
    %v322 = vsel %vm320, %v308, 0
    %324 = vmatpush.msra.mxu0 0.0
    %325 = vmatpush.msra.mxu0 0.0
    %326 = vmatpush.msra.mxu0 0.0
    %327 = vmatpush.msra.mxu0 0.0
    %328 = vmatpush.msra.mxu0 0.0
    %329 = vmatpush.msra.mxu0 0.0
    %330 = vmatpush.msra.mxu0 0.0
    %331 = vmatpush.msra.mxu0 0.0
    %332 = vmatpush.msra.mxu0 0.0
    %333 = vmatpush.msra.mxu0 0.0
    %334 = vmatpush.msra.mxu0 0.0
    %335 = vmatpush.msra.mxu0 0.0
    %336 = vmatpush.msra.mxu0 0.0
    %337 = vmatpush.msra.mxu0 0.0
    %338 = vmatpush.msra.mxu0 0.0
    %339 = vmatpush.msra.mxu0 %v322
    %340 = vmatmul.f32.gmra.mxu0 %v315
    %v341 = vpop.f32.mrf.mxu0
    %v342 = vadd.f32 0.0, %v341
    %343 = vmatmul.f32.gmra.mxu0 %v318
    %v344 = vpop.f32.mrf.mxu0
    %v345 = vadd.f32 0.0, %v344
    %346 = vdwg.mxu0
    %v348 = vsel %vm313, %v275, 0
    %v351 = vsel %vm313, %v276, 0
    %v354 = vsel %vm320, %v273, 0
    %356 = vmatpush.msra.mxu0 0.0
    %357 = vmatpush.msra.mxu0 0.0
    %358 = vmatpush.msra.mxu0 0.0
    %359 = vmatpush.msra.mxu0 0.0
    %360 = vmatpush.msra.mxu0 0.0
    %361 = vmatpush.msra.mxu0 0.0
    %362 = vmatpush.msra.mxu0 0.0
    %363 = vmatpush.msra.mxu0 0.0
    %364 = vmatpush.msra.mxu0 0.0
    %365 = vmatpush.msra.mxu0 0.0
    %366 = vmatpush.msra.mxu0 0.0
    %367 = vmatpush.msra.mxu0 0.0
    %368 = vmatpush.msra.mxu0 0.0
    %369 = vmatpush.msra.mxu0 0.0
    %370 = vmatpush.msra.mxu0 0.0
    %371 = vmatpush.msra.mxu0 %v354
    %372 = vmatmul.f32.gmra.mxu0 %v348
    %v373 = vpop.f32.mrf.mxu0
    %v374 = vadd.f32 %v342, %v373
    %375 = vmatmul.f32.gmra.mxu0 %v351
    %v376 = vpop.f32.mrf.mxu0
    %v377 = vadd.f32 %v345, %v376
    %378 = vdwg.mxu0
    %s379 = scalar_lea.vmem %s5, 192
    %v380 = vld [vmem:[%s379] sm:$0xff]
    %v381 = vld [vmem:[%s379 + $0x8] sm:$0xff]
    %v382 = vld [vmem:[%s379 + $0x10] sm:$0xff]
    %v383 = vld [vmem:[%s379 + $0x18] sm:$0xff]
    %v384 = vld [vmem:[%s379 + $0x20] sm:$0xff]
    %v385 = vld [vmem:[%s379 + $0x28] sm:$0xff]
    %v386 = vld [vmem:[%s379 + $0x30] sm:$0xff]
    %v387 = vld [vmem:[%s379 + $0x38] sm:$0xff]
    %v388 = vld [vmem:[%s379 + $0x40] sm:$0xff]
    %v389 = vld [vmem:[%s379 + $0x48] sm:$0xff]
    %v390 = vld [vmem:[%s379 + $0x50] sm:$0xff]
    %v391 = vld [vmem:[%s379 + $0x58] sm:$0xff]
    %392 = vmatpush.msra.mxu0 0.0
    %393 = vmatpush.msra.mxu0 0.0
    %394 = vmatpush.msra.mxu0 0.0
    %395 = vmatpush.msra.mxu0 0.0
    %396 = vmatpush.msra.mxu0 %v391
    %397 = vmatpush.msra.mxu0 %v390
    %398 = vmatpush.msra.mxu0 %v389
    %399 = vmatpush.msra.mxu0 %v388
    %400 = vmatpush.msra.mxu0 %v387
    %401 = vmatpush.msra.mxu0 %v386
    %402 = vmatpush.msra.mxu0 %v385
    %403 = vmatpush.msra.mxu0 %v384
    %404 = vmatpush.msra.mxu0 %v383
    %405 = vmatpush.msra.mxu0 %v382
    %406 = vmatpush.msra.mxu0 %v381
    %407 = vmatpush.msra.mxu0 %v380
    %408 = vmatmul.f32.gmra.mxu0 %v253
    %v409 = vpop.f32.mrf.mxu0
    %v410 = vadd.f32 0.0, %v409
    %411 = vdwg.mxu0
    %s412 = scalar_lea.vmem %s6, 32
    %v413 = vld [vmem:[%s412] sm:$0xff]
    %v414 = vld [vmem:[%s412 + $0x8] sm:$0x3f]
    %v416 = vsel %vm313, %v413, 0
    %v419 = vsel %vm313, %v414, 0
    %v422 = vsel %vm320, %v410, 0
    %424 = vmatpush.msra.mxu0 0.0
    %425 = vmatpush.msra.mxu0 0.0
    %426 = vmatpush.msra.mxu0 0.0
    %427 = vmatpush.msra.mxu0 0.0
    %428 = vmatpush.msra.mxu0 0.0
    %429 = vmatpush.msra.mxu0 0.0
    %430 = vmatpush.msra.mxu0 0.0
    %431 = vmatpush.msra.mxu0 0.0
    %432 = vmatpush.msra.mxu0 0.0
    %433 = vmatpush.msra.mxu0 0.0
    %434 = vmatpush.msra.mxu0 0.0
    %435 = vmatpush.msra.mxu0 0.0
    %436 = vmatpush.msra.mxu0 0.0
    %437 = vmatpush.msra.mxu0 0.0
    %438 = vmatpush.msra.mxu0 0.0
    %439 = vmatpush.msra.mxu0 %v422
    %440 = vmatmul.f32.gmra.mxu0 %v416
    %v441 = vpop.f32.mrf.mxu0
    %v442 = vadd.f32 0.0, %v441
    %443 = vmatmul.f32.gmra.mxu0 %v419
    %v444 = vpop.f32.mrf.mxu0
    %v445 = vadd.f32 0.0, %v444
    %446 = vdwg.mxu0
    %v447 = vadd.f32 %v374, %v442
    %v448 = vadd.f32 %v377, %v445
    %v449 = vld [vmem:[%s7] sm:$0x1]
    %v451 = vperm.slane %v449, 0
    %v453 = vadd.f32 %v447, %v451
    %v454 = vadd.f32 %v448, %v451
    %vm455 = vcmask 916480
    %v456 = vsel %vm455, %v453, 0.0
    %vm457 = vcmask 914432
    %v458 = vsel %vm457, %v454, 0.0
    %v459 = vadd.f32 %v456, %v458
    %v460 = vrot.slane %v459, 4
    %v461 = vadd.f32 %v459, %v460
    %v462 = vrot.slane %v461, 2
    %v463 = vadd.f32 %v461, %v462
    %v464 = vrot.slane %v463, 1
    %v465 = vadd.f32 %v463, %v464
    %v466 = vmul.f32 %v453, %v453
    %v467 = vmul.f32 %v454, %v454
    %v468 = vsel %vm455, %v466, 0.0
    %v469 = vsel %vm457, %v467, 0.0
    %v470 = vadd.f32 %v468, %v469
    %v471 = vrot.slane %v470, 4
    %v472 = vadd.f32 %v470, %v471
    %v473 = vrot.slane %v472, 2
    %v474 = vadd.f32 %v472, %v473
    %v475 = vrot.slane %v474, 1
    %v476 = vadd.f32 %v474, %v475
    %vm477 = vcmask 1040384
    %v478 = vsel %vm477, %v465, %v476
    %v479 = vld [vmem:[%s8] sm:$0xff]
    %v480 = vld [vmem:[%s8 + $0x8] sm:$0xff]
    %v481 = vld [vmem:[%s8 + $0x10] sm:$0xff]
    %v482 = vld [vmem:[%s8 + $0x18] sm:$0xff]
    %v483 = vld [vmem:[%s8 + $0x20] sm:$0xff]
    %v484 = vld [vmem:[%s8 + $0x28] sm:$0xff]
    %v485 = vld [vmem:[%s8 + $0x30] sm:$0xff]
    %v486 = vld [vmem:[%s8 + $0x38] sm:$0xff]
    %v487 = vld [vmem:[%s8 + $0x40] sm:$0xff]
    %v488 = vld [vmem:[%s8 + $0x48] sm:$0xff]
    %v489 = vld [vmem:[%s8 + $0x50] sm:$0xff]
    %v490 = vld [vmem:[%s8 + $0x58] sm:$0xff]
    %v491 = vld [vmem:[%s8 + $0x60] sm:$0xff]
    %v492 = vld [vmem:[%s8 + $0x68] sm:$0xff]
    %v494 = vsel %vm455, %v478, 0
    %496 = vmatpush.msra.mxu0 0.0
    %497 = vmatpush.msra.mxu0 0.0
    %498 = vmatpush.msra.mxu0 %v492
    %499 = vmatpush.msra.mxu0 %v491
    %500 = vmatpush.msra.mxu0 %v490
    %501 = vmatpush.msra.mxu0 %v489
    %502 = vmatpush.msra.mxu0 %v488
    %503 = vmatpush.msra.mxu0 %v487
    %504 = vmatpush.msra.mxu0 %v486
    %505 = vmatpush.msra.mxu0 %v485
    %506 = vmatpush.msra.mxu0 %v484
    %507 = vmatpush.msra.mxu0 %v483
    %508 = vmatpush.msra.mxu0 %v482
    %509 = vmatpush.msra.mxu0 %v481
    %510 = vmatpush.msra.mxu0 %v480
    %511 = vmatpush.msra.mxu0 %v479
    %512 = vmatmul.f32.gmra.mxu0 %v494
    %v513 = vpop.f32.mrf.mxu0
    %v514 = vadd.f32 0.0, %v513
    %515 = vdwg.mxu0
    %v516 = vrcp.pop 98.0
    %v517 = vmul.f32 98.0, %v516
    %v518 = vsub.f32 1.0, %v517
    %v519 = vmul.f32 %v516, %v518
    %v520 = vadd.f32 %v516, %v519
    %vm521 = vweird.f32 %v516
    %v522 = vsel %vm521, %v516, %v520
    %v523 = vmul.f32 %v514, %v522
    %v524 = vmul.f32 %v523, %v523
    %v526 = vrot.slane %v524, 7
    %v528 = vsub.f32 %v523, %v526
    %v529 = vmax.f32 %v528, 0.0
    %v530 = vadd.f32 %v529, 1e-05
    %v531 = vrsqrt.pop %v530
    %v532 = vmul.f32 %v531, %v530
    %v533 = vmul.f32 %v532, %v531
    %v534 = vmul.f32 0.5, %v533
    %v535 = vsub.f32 1.5, %v534
    %v536 = vmul.f32 %v531, %v535
    %vm537 = vweird.f32 %v530
    %vm538 = vweird.f32 %v531
    %vm539 = vmor %vm537, %vm538
    %v540 = vsel %vm539, %v531, %v536
    %v541 = vld [vmem:[%s10] sm:$0x1]
    %543 = vst [vmem:[#allocation1] sm:$0xff] %v540
    %s544 = scalar_lea.vmem [#allocation1], 1
    %v545 = vld [vmem:[%s544] ss:$9 sm:$0xff]
    %v547 = vmul.f32 %v541, %v545
    %v548 = vld [vmem:[%s11] sm:$0x1]
    %v549 = vmul.f32 %v523, %v547
    %v550 = vsub.f32 %v548, %v549
    %v552 = vperm.slane %v550, 0
    %v554 = vsel %vm477, %v547, %v552
    %v555 = vld [vmem:[%s9] sm:$0xff]
    %v556 = vld [vmem:[%s9 + $0x8] sm:$0xff]
    %vm557 = vcmask 130048
    %v559 = vsel %vm557, %v554, 0
    %561 = vmatpush.msra.mxu0 0.0
    %562 = vmatpush.msra.mxu0 0.0
    %563 = vmatpush.msra.mxu0 0.0
    %564 = vmatpush.msra.mxu0 0.0
    %565 = vmatpush.msra.mxu0 0.0
    %566 = vmatpush.msra.mxu0 0.0
    %567 = vmatpush.msra.mxu0 0.0
    %568 = vmatpush.msra.mxu0 0.0
    %569 = vmatpush.msra.mxu0 0.0
    %570 = vmatpush.msra.mxu0 0.0
    %571 = vmatpush.msra.mxu0 0.0
    %572 = vmatpush.msra.mxu0 0.0
    %573 = vmatpush.msra.mxu0 0.0
    %574 = vmatpush.msra.mxu0 0.0
    %575 = vmatpush.msra.mxu0 %v556
    %576 = vmatpush.msra.mxu0 %v555
    %577 = vmatmul.f32.gmra.mxu0 %v559
    %v578 = vpop.f32.mrf.mxu0
    %v579 = vadd.f32 0.0, %v578
    %580 = vdwg.mxu0
    %v581 = vperm.slane %v579, 0
    %v582 = vmul.f32 %v453, %v581
    %v583 = vmul.f32 %v454, %v581
    %v584 = vperm.slane %v579, 1
    %v585 = vadd.f32 %v582, %v584
    %v586 = vadd.f32 %v583, %v584
    %v587 = vmax.f32 %v585, 0.0
    %v588 = vmax.f32 %v586, 0.0
    %v589 = vld [vmem:[%s12] sm:$0xff]
    %v590 = vld [vmem:[%s12 + $0x8] sm:$0xff]
    %v591 = vld [vmem:[%s12 + $0x10] sm:$0xff]
    %v592 = vld [vmem:[%s12 + $0x18] sm:$0xff]
    %v593 = vld [vmem:[%s12 + $0x20] sm:$0xff]
    %v594 = vld [vmem:[%s12 + $0x28] sm:$0xff]
    %v595 = vld [vmem:[%s12 + $0x30] sm:$0xff]
    %v596 = vld [vmem:[%s12 + $0x38] sm:$0xff]
    %v597 = vld [vmem:[%s12 + $0x40] sm:$0xff]
    %v598 = vld [vmem:[%s12 + $0x48] sm:$0xff]
    %v599 = vld [vmem:[%s12 + $0x50] sm:$0xff]
    %v600 = vld [vmem:[%s12 + $0x58] sm:$0xff]
    %v601 = vld [vmem:[%s12 + $0x60] sm:$0xff]
    %v602 = vld [vmem:[%s12 + $0x68] sm:$0xff]
    %v604 = vsel %vm455, %v587, 0
    %v607 = vsel %vm455, %v588, 0
    %609 = vmatpush.msra.mxu0 0.0
    %610 = vmatpush.msra.mxu0 0.0
    %611 = vmatpush.msra.mxu0 %v602
    %612 = vmatpush.msra.mxu0 %v601
    %613 = vmatpush.msra.mxu0 %v600
    %614 = vmatpush.msra.mxu0 %v599
    %615 = vmatpush.msra.mxu0 %v598
    %616 = vmatpush.msra.mxu0 %v597
    %617 = vmatpush.msra.mxu0 %v596
    %618 = vmatpush.msra.mxu0 %v595
    %619 = vmatpush.msra.mxu0 %v594
    %620 = vmatpush.msra.mxu0 %v593
    %621 = vmatpush.msra.mxu0 %v592
    %622 = vmatpush.msra.mxu0 %v591
    %623 = vmatpush.msra.mxu0 %v590
    %624 = vmatpush.msra.mxu0 %v589
    %625 = vmatmul.f32.gmra.mxu0 %v604
    %v626 = vpop.f32.mrf.mxu0
    %v627 = vadd.f32 0.0, %v626
    %628 = vmatmul.f32.gmra.mxu0 %v607
    %v629 = vpop.f32.mrf.mxu0
    %v630 = vadd.f32 0.0, %v629
    %631 = vdwg.mxu0
    %v632 = vld [vmem:[%s13] sm:$0xff]
    %v633 = vld [vmem:[%s13 + $0x8] sm:$0xff]
    %v634 = vld [vmem:[%s13 + $0x10] sm:$0xff]
    %v635 = vld [vmem:[%s13 + $0x18] sm:$0xf]
    %s636 = scalar_lea.vmem %s12, 112
    %v637 = vld [vmem:[%s636] sm:$0xff]
    %v638 = vld [vmem:[%s636 + $0x8] sm:$0xff]
    %v639 = vld [vmem:[%s636 + $0x10] sm:$0xff]
    %v640 = vld [vmem:[%s636 + $0x18] sm:$0xff]
    %v641 = vld [vmem:[%s636 + $0x20] sm:$0xff]
    %v642 = vld [vmem:[%s636 + $0x28] sm:$0xff]
    %v643 = vld [vmem:[%s636 + $0x30] sm:$0xff]
    %v644 = vld [vmem:[%s636 + $0x38] sm:$0xff]
    %v645 = vld [vmem:[%s636 + $0x40] sm:$0xff]
    %v646 = vld [vmem:[%s636 + $0x48] sm:$0xff]
    %v647 = vld [vmem:[%s636 + $0x50] sm:$0xff]
    %v648 = vld [vmem:[%s636 + $0x58] sm:$0xff]
    %v649 = vld [vmem:[%s636 + $0x60] sm:$0xff]
    %v650 = vld [vmem:[%s636 + $0x68] sm:$0xff]
    %651 = vmatpush.msra.mxu0 0.0
    %652 = vmatpush.msra.mxu0 0.0
    %653 = vmatpush.msra.mxu0 %v650
    %654 = vmatpush.msra.mxu0 %v649
    %655 = vmatpush.msra.mxu0 %v648
    %656 = vmatpush.msra.mxu0 %v647
    %657 = vmatpush.msra.mxu0 %v646
    %658 = vmatpush.msra.mxu0 %v645
    %659 = vmatpush.msra.mxu0 %v644
    %660 = vmatpush.msra.mxu0 %v643
    %661 = vmatpush.msra.mxu0 %v642
    %662 = vmatpush.msra.mxu0 %v641
    %663 = vmatpush.msra.mxu0 %v640
    %664 = vmatpush.msra.mxu0 %v639
    %665 = vmatpush.msra.mxu0 %v638
    %666 = vmatpush.msra.mxu0 %v637
    %667 = vmatmul.f32.gmra.mxu0 %v604
    %v668 = vpop.f32.mrf.mxu0
    %v669 = vadd.f32 0.0, %v668
    %670 = vmatmul.f32.gmra.mxu0 %v607
    %v671 = vpop.f32.mrf.mxu0
    %v672 = vadd.f32 0.0, %v671
    %673 = vdwg.mxu0
    %s674 = scalar_lea.vmem %s13, 32
    %v675 = vld [vmem:[%s674] sm:$0xff]
    %v676 = vld [vmem:[%s674 + $0x8] sm:$0xff]
    %v677 = vld [vmem:[%s674 + $0x10] sm:$0xff]
    %v678 = vld [vmem:[%s674 + $0x18] sm:$0xf]
    %vm679 = vcmask 113664
    %v681 = vsel %vm679, %v675, 0
    %v684 = vsel %vm679, %v676, 0
    %v687 = vsel %vm679, %v677, 0
    %v690 = vsel %vm679, %v678, 0
    %v693 = vsel %vm320, %v672, 0
    %695 = vmatpush.msra.mxu0 0.0
    %696 = vmatpush.msra.mxu0 0.0
    %697 = vmatpush.msra.mxu0 0.0
    %698 = vmatpush.msra.mxu0 0.0
    %699 = vmatpush.msra.mxu0 0.0
    %700 = vmatpush.msra.mxu0 0.0
    %701 = vmatpush.msra.mxu0 0.0
    %702 = vmatpush.msra.mxu0 0.0
    %703 = vmatpush.msra.mxu0 0.0
    %704 = vmatpush.msra.mxu0 0.0
    %705 = vmatpush.msra.mxu0 0.0
    %706 = vmatpush.msra.mxu0 0.0
    %707 = vmatpush.msra.mxu0 0.0
    %708 = vmatpush.msra.mxu0 0.0
    %709 = vmatpush.msra.mxu0 %v693
    %710 = vmatpush.msra.mxu0 %v669
    %711 = vmatmul.f32.gmra.mxu0 %v681
    %v712 = vpop.f32.mrf.mxu0
    %v713 = vadd.f32 0.0, %v712
    %714 = vmatmul.f32.gmra.mxu0 %v684
    %v715 = vpop.f32.mrf.mxu0
    %v716 = vadd.f32 0.0, %v715
    %717 = vmatmul.f32.gmra.mxu0 %v687
    %v718 = vpop.f32.mrf.mxu0
    %v719 = vadd.f32 0.0, %v718
    %720 = vmatmul.f32.gmra.mxu0 %v690
    %v721 = vpop.f32.mrf.mxu0
    %v722 = vadd.f32 0.0, %v721
    %723 = vdwg.mxu0
    %v725 = vsel %vm679, %v632, 0
    %v728 = vsel %vm679, %v633, 0
    %v731 = vsel %vm679, %v634, 0
    %v734 = vsel %vm679, %v635, 0
    %v737 = vsel %vm320, %v630, 0
    %739 = vmatpush.msra.mxu0 0.0
    %740 = vmatpush.msra.mxu0 0.0
    %741 = vmatpush.msra.mxu0 0.0
    %742 = vmatpush.msra.mxu0 0.0
    %743 = vmatpush.msra.mxu0 0.0
    %744 = vmatpush.msra.mxu0 0.0
    %745 = vmatpush.msra.mxu0 0.0
    %746 = vmatpush.msra.mxu0 0.0
    %747 = vmatpush.msra.mxu0 0.0
    %748 = vmatpush.msra.mxu0 0.0
    %749 = vmatpush.msra.mxu0 0.0
    %750 = vmatpush.msra.mxu0 0.0
    %751 = vmatpush.msra.mxu0 0.0
    %752 = vmatpush.msra.mxu0 0.0
    %753 = vmatpush.msra.mxu0 %v737
    %754 = vmatpush.msra.mxu0 %v627
    %755 = vmatmul.f32.gmra.mxu0 %v725
    %v756 = vpop.f32.mrf.mxu0
    %v757 = vadd.f32 %v713, %v756
    %758 = vmatmul.f32.gmra.mxu0 %v728
    %v759 = vpop.f32.mrf.mxu0
    %v760 = vadd.f32 %v716, %v759
    %761 = vmatmul.f32.gmra.mxu0 %v731
    %v762 = vpop.f32.mrf.mxu0
    %v763 = vadd.f32 %v719, %v762
    %764 = vmatmul.f32.gmra.mxu0 %v734
    %v765 = vpop.f32.mrf.mxu0
    %v766 = vadd.f32 %v722, %v765
    %767 = vdwg.mxu0
    %s768 = scalar_lea.vmem %s12, 224
    %v769 = vld [vmem:[%s768] sm:$0xff]
    %v770 = vld [vmem:[%s768 + $0x8] sm:$0xff]
    %v771 = vld [vmem:[%s768 + $0x10] sm:$0xff]
    %v772 = vld [vmem:[%s768 + $0x18] sm:$0xff]
    %v773 = vld [vmem:[%s768 + $0x20] sm:$0xff]
    %v774 = vld [vmem:[%s768 + $0x28] sm:$0xff]
    %v775 = vld [vmem:[%s768 + $0x30] sm:$0xff]
    %v776 = vld [vmem:[%s768 + $0x38] sm:$0xff]
    %v777 = vld [vmem:[%s768 + $0x40] sm:$0xff]
    %v778 = vld [vmem:[%s768 + $0x48] sm:$0xff]
    %v779 = vld [vmem:[%s768 + $0x50] sm:$0xff]
    %v780 = vld [vmem:[%s768 + $0x58] sm:$0xff]
    %v781 = vld [vmem:[%s768 + $0x60] sm:$0xff]
    %v782 = vld [vmem:[%s768 + $0x68] sm:$0xff]
    %783 = vmatpush.msra.mxu0 0.0
    %784 = vmatpush.msra.mxu0 0.0
    %785 = vmatpush.msra.mxu0 %v782
    %786 = vmatpush.msra.mxu0 %v781
    %787 = vmatpush.msra.mxu0 %v780
    %788 = vmatpush.msra.mxu0 %v779
    %789 = vmatpush.msra.mxu0 %v778
    %790 = vmatpush.msra.mxu0 %v777
    %791 = vmatpush.msra.mxu0 %v776
    %792 = vmatpush.msra.mxu0 %v775
    %793 = vmatpush.msra.mxu0 %v774
    %794 = vmatpush.msra.mxu0 %v773
    %795 = vmatpush.msra.mxu0 %v772
    %796 = vmatpush.msra.mxu0 %v771
    %797 = vmatpush.msra.mxu0 %v770
    %798 = vmatpush.msra.mxu0 %v769
    %799 = vmatmul.f32.gmra.mxu0 %v604
    %v800 = vpop.f32.mrf.mxu0
    %v801 = vadd.f32 0.0, %v800
    %802 = vmatmul.f32.gmra.mxu0 %v607
    %v803 = vpop.f32.mrf.mxu0
    %v804 = vadd.f32 0.0, %v803
    %805 = vdwg.mxu0
    %s806 = scalar_lea.vmem %s13, 64
    %v807 = vld [vmem:[%s806] sm:$0xff]
    %v808 = vld [vmem:[%s806 + $0x8] sm:$0xff]
    %v809 = vld [vmem:[%s806 + $0x10] sm:$0xff]
    %v810 = vld [vmem:[%s806 + $0x18] sm:$0xf]
    %v812 = vsel %vm679, %v807, 0
    %v815 = vsel %vm679, %v808, 0
    %v818 = vsel %vm679, %v809, 0
    %v821 = vsel %vm679, %v810, 0
    %v824 = vsel %vm320, %v804, 0
    %826 = vmatpush.msra.mxu0 0.0
    %827 = vmatpush.msra.mxu0 0.0
    %828 = vmatpush.msra.mxu0 0.0
    %829 = vmatpush.msra.mxu0 0.0
    %830 = vmatpush.msra.mxu0 0.0
    %831 = vmatpush.msra.mxu0 0.0
    %832 = vmatpush.msra.mxu0 0.0
    %833 = vmatpush.msra.mxu0 0.0
    %834 = vmatpush.msra.mxu0 0.0
    %835 = vmatpush.msra.mxu0 0.0
    %836 = vmatpush.msra.mxu0 0.0
    %837 = vmatpush.msra.mxu0 0.0
    %838 = vmatpush.msra.mxu0 0.0
    %839 = vmatpush.msra.mxu0 0.0
    %840 = vmatpush.msra.mxu0 %v824
    %841 = vmatpush.msra.mxu0 %v801
    %842 = vmatmul.f32.gmra.mxu0 %v812
    %v843 = vpop.f32.mrf.mxu0
    %v844 = vadd.f32 0.0, %v843
    %845 = vmatmul.f32.gmra.mxu0 %v815
    %v846 = vpop.f32.mrf.mxu0
    %v847 = vadd.f32 0.0, %v846
    %848 = vmatmul.f32.gmra.mxu0 %v818
    %v849 = vpop.f32.mrf.mxu0
    %v850 = vadd.f32 0.0, %v849
    %851 = vmatmul.f32.gmra.mxu0 %v821
    %v852 = vpop.f32.mrf.mxu0
    %v853 = vadd.f32 0.0, %v852
    %854 = vdwg.mxu0
    %v855 = vadd.f32 %v757, %v844
    %v856 = vadd.f32 %v760, %v847
    %v857 = vadd.f32 %v763, %v850
    %v858 = vadd.f32 %v766, %v853
    %v859 = vld [vmem:[%s14] sm:$0x1]
    %v861 = vperm.slane %v859, 0
    %v863 = vadd.f32 %v855, %v861
    %v864 = vadd.f32 %v856, %v861
    %v865 = vadd.f32 %v857, %v861
    %v866 = vadd.f32 %v858, %v861
    %v867 = vsel %vm455, %v863, 0.0
    %v868 = vsel %vm455, %v864, 0.0
    %v869 = vadd.f32 %v867, %v868
    %v870 = vsel %vm455, %v865, 0.0
    %v871 = vadd.f32 %v869, %v870
    %vm872 = vcmask 912384
    %v873 = vsel %vm872, %v866, 0.0
    %v874 = vadd.f32 %v871, %v873
    %v875 = vrot.slane %v874, 4
    %v876 = vadd.f32 %v874, %v875
    %v877 = vrot.slane %v876, 2
    %v878 = vadd.f32 %v876, %v877
    %v879 = vrot.slane %v878, 1
    %v880 = vadd.f32 %v878, %v879
    %v881 = vmul.f32 %v863, %v863
    %v882 = vmul.f32 %v864, %v864
    %v883 = vmul.f32 %v865, %v865
    %v884 = vmul.f32 %v866, %v866
    %v885 = vsel %vm455, %v881, 0.0
    %v886 = vsel %vm455, %v882, 0.0
    %v887 = vadd.f32 %v885, %v886
    %v888 = vsel %vm455, %v883, 0.0
    %v889 = vadd.f32 %v887, %v888
    %v890 = vsel %vm872, %v884, 0.0
    %v891 = vadd.f32 %v889, %v890
    %v892 = vrot.slane %v891, 4
    %v893 = vadd.f32 %v891, %v892
    %v894 = vrot.slane %v893, 2
    %v895 = vadd.f32 %v893, %v894
    %v896 = vrot.slane %v895, 1
    %v897 = vadd.f32 %v895, %v896
    %v898 = vsel %vm477, %v880, %v897
    %v899 = vld [vmem:[%s15] sm:$0xff]
    %v900 = vld [vmem:[%s15 + $0x8] sm:$0xff]
    %v901 = vld [vmem:[%s15 + $0x10] sm:$0xff]
    %v902 = vld [vmem:[%s15 + $0x18] sm:$0xff]
    %v903 = vld [vmem:[%s15 + $0x20] sm:$0xff]
    %v904 = vld [vmem:[%s15 + $0x28] sm:$0xff]
    %v905 = vld [vmem:[%s15 + $0x30] sm:$0xff]
    %v906 = vld [vmem:[%s15 + $0x38] sm:$0xff]
    %v907 = vld [vmem:[%s15 + $0x40] sm:$0xff]
    %v908 = vld [vmem:[%s15 + $0x48] sm:$0xff]
    %v909 = vld [vmem:[%s15 + $0x50] sm:$0xff]
    %v910 = vld [vmem:[%s15 + $0x58] sm:$0xff]
    %v911 = vld [vmem:[%s15 + $0x60] sm:$0xff]
    %v912 = vld [vmem:[%s15 + $0x68] sm:$0xff]
    %v914 = vsel %vm455, %v898, 0
    %916 = vmatpush.msra.mxu0 0.0
    %917 = vmatpush.msra.mxu0 0.0
    %918 = vmatpush.msra.mxu0 %v912
    %919 = vmatpush.msra.mxu0 %v911
    %920 = vmatpush.msra.mxu0 %v910
    %921 = vmatpush.msra.mxu0 %v909
    %922 = vmatpush.msra.mxu0 %v908
    %923 = vmatpush.msra.mxu0 %v907
    %924 = vmatpush.msra.mxu0 %v906
    %925 = vmatpush.msra.mxu0 %v905
    %926 = vmatpush.msra.mxu0 %v904
    %927 = vmatpush.msra.mxu0 %v903
    %928 = vmatpush.msra.mxu0 %v902
    %929 = vmatpush.msra.mxu0 %v901
    %930 = vmatpush.msra.mxu0 %v900
    %931 = vmatpush.msra.mxu0 %v899
    %932 = vmatmul.f32.gmra.mxu0 %v914
    %v933 = vpop.f32.mrf.mxu0
    %v934 = vadd.f32 0.0, %v933
    %935 = vdwg.mxu0
    %v936 = vrcp.pop 392.0
    %v937 = vmul.f32 392.0, %v936
    %v938 = vsub.f32 1.0, %v937
    %v939 = vmul.f32 %v936, %v938
    %v940 = vadd.f32 %v936, %v939
    %vm941 = vweird.f32 %v936
    %v942 = vsel %vm941, %v936, %v940
    %v943 = vmul.f32 %v934, %v942
    %v944 = vmul.f32 %v943, %v943
    %v946 = vrot.slane %v944, 7
    %v948 = vsub.f32 %v943, %v946
    %v949 = vmax.f32 %v948, 0.0
    %v950 = vadd.f32 %v949, 1e-05
    %v951 = vrsqrt.pop %v950
    %v952 = vmul.f32 %v951, %v950
    %v953 = vmul.f32 %v952, %v951
    %v954 = vmul.f32 0.5, %v953
    %v955 = vsub.f32 1.5, %v954
    %v956 = vmul.f32 %v951, %v955
    %vm957 = vweird.f32 %v950
    %vm958 = vweird.f32 %v951
    %vm959 = vmor %vm957, %vm958
    %v960 = vsel %vm959, %v951, %v956
    %v961 = vld [vmem:[%s17] sm:$0x1]
    %963 = vst [vmem:[#allocation1] sm:$0xff] %v960
    %s964 = scalar_lea.vmem [#allocation1], 1
    %v965 = vld [vmem:[%s964] ss:$9 sm:$0xff]
    %v967 = vmul.f32 %v961, %v965
    %v968 = vld [vmem:[%s18] sm:$0x1]
    %v969 = vmul.f32 %v943, %v967
    %v970 = vsub.f32 %v968, %v969
    %v972 = vperm.slane %v970, 0
    %v974 = vsel %vm477, %v967, %v972
    %v975 = vld [vmem:[%s16] sm:$0xff]
    %vm976 = vcmask 64512
    %v978 = vsel %vm976, %v974, 0
    %980 = vmatpush.msra.mxu0 0.0
    %981 = vmatpush.msra.mxu0 0.0
    %982 = vmatpush.msra.mxu0 0.0
    %983 = vmatpush.msra.mxu0 0.0
    %984 = vmatpush.msra.mxu0 0.0
    %985 = vmatpush.msra.mxu0 0.0
    %986 = vmatpush.msra.mxu0 0.0
    %987 = vmatpush.msra.mxu0 0.0
    %988 = vmatpush.msra.mxu0 0.0
    %989 = vmatpush.msra.mxu0 0.0
    %990 = vmatpush.msra.mxu0 0.0
    %991 = vmatpush.msra.mxu0 0.0
    %992 = vmatpush.msra.mxu0 0.0
    %993 = vmatpush.msra.mxu0 0.0
    %994 = vmatpush.msra.mxu0 0.0
    %995 = vmatpush.msra.mxu0 %v975
    %996 = vmatmul.f32.gmra.mxu0 %v978
    %v997 = vpop.f32.mrf.mxu0
    %v998 = vadd.f32 0.0, %v997
    %999 = vdwg.mxu0
    %v1000 = vperm.slane %v998, 0
    %v1001 = vmul.f32 %v863, %v1000
    %v1002 = vmul.f32 %v864, %v1000
    %v1003 = vmul.f32 %v865, %v1000
    %v1004 = vmul.f32 %v866, %v1000
    %v1005 = vperm.slane %v998, 1
    %v1006 = vadd.f32 %v1001, %v1005
    %v1007 = vadd.f32 %v1002, %v1005
    %v1008 = vadd.f32 %v1003, %v1005
    %v1009 = vadd.f32 %v1004, %v1005
    %v1010 = vmax.f32 %v1006, 0.0
    %v1011 = vmax.f32 %v1007, 0.0
    %v1012 = vmax.f32 %v1008, 0.0
    %v1013 = vmax.f32 %v1009, 0.0
    %v1014 = vld [vmem:[%s19] sm:$0xff]
    %v1015 = vld [vmem:[%s19 + $0x8] sm:$0xff]
    %v1016 = vld [vmem:[%s19 + $0x10] sm:$0xff]
    %v1017 = vld [vmem:[%s19 + $0x18] sm:$0xff]
    %v1018 = vld [vmem:[%s19 + $0x20] sm:$0xff]
    %v1019 = vld [vmem:[%s19 + $0x28] sm:$0xff]
    %v1020 = vld [vmem:[%s19 + $0x30] sm:$0xff]
    %v1021 = vld [vmem:[%s19 + $0x38] sm:$0xff]
    %v1022 = vld [vmem:[%s19 + $0x40] sm:$0xff]
    %v1023 = vld [vmem:[%s19 + $0x48] sm:$0xff]
    %v1024 = vld [vmem:[%s19 + $0x50] sm:$0xff]
    %v1025 = vld [vmem:[%s19 + $0x58] sm:$0xff]
    %v1026 = vld [vmem:[%s19 + $0x60] sm:$0xff]
    %v1027 = vld [vmem:[%s19 + $0x68] sm:$0xff]
    %v1029 = vsel %vm455, %v1010, 0
    %v1032 = vsel %vm455, %v1011, 0
    %v1035 = vsel %vm455, %v1012, 0
    %v1038 = vsel %vm455, %v1013, 0
    %1040 = vmatpush.msra.mxu0 0.0
    %1041 = vmatpush.msra.mxu0 0.0
    %1042 = vmatpush.msra.mxu0 %v1027
    %1043 = vmatpush.msra.mxu0 %v1026
    %1044 = vmatpush.msra.mxu0 %v1025
    %1045 = vmatpush.msra.mxu0 %v1024
    %1046 = vmatpush.msra.mxu0 %v1023
    %1047 = vmatpush.msra.mxu0 %v1022
    %1048 = vmatpush.msra.mxu0 %v1021
    %1049 = vmatpush.msra.mxu0 %v1020
    %1050 = vmatpush.msra.mxu0 %v1019
    %1051 = vmatpush.msra.mxu0 %v1018
    %1052 = vmatpush.msra.mxu0 %v1017
    %1053 = vmatpush.msra.mxu0 %v1016
    %1054 = vmatpush.msra.mxu0 %v1015
    %1055 = vmatpush.msra.mxu0 %v1014
    %1056 = vmatmul.f32.gmra.mxu0 %v1029
    %v1057 = vpop.f32.mrf.mxu0
    %v1058 = vadd.f32 0.0, %v1057
    %1059 = vmatmul.f32.gmra.mxu0 %v1032
    %v1060 = vpop.f32.mrf.mxu0
    %v1061 = vadd.f32 0.0, %v1060
    %1062 = vmatmul.f32.gmra.mxu0 %v1035
    %v1063 = vpop.f32.mrf.mxu0
    %v1064 = vadd.f32 0.0, %v1063
    %1065 = vmatmul.f32.gmra.mxu0 %v1038
    %v1066 = vpop.f32.mrf.mxu0
    %v1067 = vadd.f32 0.0, %v1066
    %1068 = vdwg.mxu0
    %v1069 = vld [vmem:[%s20] sm:$0xff]
    %v1070 = vld [vmem:[%s20 + $0x8] sm:$0xff]
    %v1071 = vld [vmem:[%s20 + $0x10] sm:$0xff]
    %v1072 = vld [vmem:[%s20 + $0x18] sm:$0xff]
    %v1073 = vld [vmem:[%s20 + $0x20] sm:$0xff]
    %v1074 = vld [vmem:[%s20 + $0x28] sm:$0xff]
    %v1075 = vld [vmem:[%s20 + $0x30] sm:$0xff]
    %s1076 = scalar_lea.vmem %s19, 112
    %v1077 = vld [vmem:[%s1076] sm:$0xff]
    %v1078 = vld [vmem:[%s1076 + $0x8] sm:$0xff]
    %v1079 = vld [vmem:[%s1076 + $0x10] sm:$0xff]
    %v1080 = vld [vmem:[%s1076 + $0x18] sm:$0xff]
    %v1081 = vld [vmem:[%s1076 + $0x20] sm:$0xff]
    %v1082 = vld [vmem:[%s1076 + $0x28] sm:$0xff]
    %v1083 = vld [vmem:[%s1076 + $0x30] sm:$0xff]
    %v1084 = vld [vmem:[%s1076 + $0x38] sm:$0xff]
    %v1085 = vld [vmem:[%s1076 + $0x40] sm:$0xff]
    %v1086 = vld [vmem:[%s1076 + $0x48] sm:$0xff]
    %v1087 = vld [vmem:[%s1076 + $0x50] sm:$0xff]
    %v1088 = vld [vmem:[%s1076 + $0x58] sm:$0xff]
    %v1089 = vld [vmem:[%s1076 + $0x60] sm:$0xff]
    %v1090 = vld [vmem:[%s1076 + $0x68] sm:$0xff]
    %1091 = vmatpush.msra.mxu0 0.0
    %1092 = vmatpush.msra.mxu0 0.0
    %1093 = vmatpush.msra.mxu0 %v1090
    %1094 = vmatpush.msra.mxu0 %v1089
    %1095 = vmatpush.msra.mxu0 %v1088
    %1096 = vmatpush.msra.mxu0 %v1087
    %1097 = vmatpush.msra.mxu0 %v1086
    %1098 = vmatpush.msra.mxu0 %v1085
    %1099 = vmatpush.msra.mxu0 %v1084
    %1100 = vmatpush.msra.mxu0 %v1083
    %1101 = vmatpush.msra.mxu0 %v1082
    %1102 = vmatpush.msra.mxu0 %v1081
    %1103 = vmatpush.msra.mxu0 %v1080
    %1104 = vmatpush.msra.mxu0 %v1079
    %1105 = vmatpush.msra.mxu0 %v1078
    %1106 = vmatpush.msra.mxu0 %v1077
    %1107 = vmatmul.f32.gmra.mxu0 %v1029
    %v1108 = vpop.f32.mrf.mxu0
    %v1109 = vadd.f32 0.0, %v1108
    %1110 = vmatmul.f32.gmra.mxu0 %v1032
    %v1111 = vpop.f32.mrf.mxu0
    %v1112 = vadd.f32 0.0, %v1111
    %1113 = vmatmul.f32.gmra.mxu0 %v1035
    %v1114 = vpop.f32.mrf.mxu0
    %v1115 = vadd.f32 0.0, %v1114
    %1116 = vmatmul.f32.gmra.mxu0 %v1038
    %v1117 = vpop.f32.mrf.mxu0
    %v1118 = vadd.f32 0.0, %v1117
    %1119 = vdwg.mxu0
    %s1120 = scalar_lea.vmem %s20, 56
    %v1121 = vld [vmem:[%s1120] sm:$0xff]
    %v1122 = vld [vmem:[%s1120 + $0x8] sm:$0xff]
    %v1123 = vld [vmem:[%s1120 + $0x10] sm:$0xff]
    %v1124 = vld [vmem:[%s1120 + $0x18] sm:$0xff]
    %v1125 = vld [vmem:[%s1120 + $0x20] sm:$0xff]
    %v1126 = vld [vmem:[%s1120 + $0x28] sm:$0xff]
    %v1127 = vld [vmem:[%s1120 + $0x30] sm:$0xff]
    %vm1128 = vcmask 228352
    %v1130 = vsel %vm1128, %v1121, 0
    %v1133 = vsel %vm1128, %v1122, 0
    %v1136 = vsel %vm1128, %v1123, 0
    %v1139 = vsel %vm1128, %v1124, 0
    %v1142 = vsel %vm1128, %v1125, 0
    %v1145 = vsel %vm1128, %v1126, 0
    %v1148 = vsel %vm1128, %v1127, 0
    %v1151 = vsel %vm82, %v1118, 0
    %1153 = vmatpush.msra.mxu0 0.0
    %1154 = vmatpush.msra.mxu0 0.0
    %1155 = vmatpush.msra.mxu0 0.0
    %1156 = vmatpush.msra.mxu0 0.0
    %1157 = vmatpush.msra.mxu0 0.0
    %1158 = vmatpush.msra.mxu0 0.0
    %1159 = vmatpush.msra.mxu0 0.0
    %1160 = vmatpush.msra.mxu0 0.0
    %1161 = vmatpush.msra.mxu0 0.0
    %1162 = vmatpush.msra.mxu0 0.0
    %1163 = vmatpush.msra.mxu0 0.0
    %1164 = vmatpush.msra.mxu0 0.0
    %1165 = vmatpush.msra.mxu0 %v1151
    %1166 = vmatpush.msra.mxu0 %v1115
    %1167 = vmatpush.msra.mxu0 %v1112
    %1168 = vmatpush.msra.mxu0 %v1109
    %1169 = vmatmul.f32.gmra.mxu0 %v1130
    %v1170 = vpop.f32.mrf.mxu0
    %v1171 = vadd.f32 0.0, %v1170
    %1172 = vmatmul.f32.gmra.mxu0 %v1133
    %v1173 = vpop.f32.mrf.mxu0
    %v1174 = vadd.f32 0.0, %v1173
    %1175 = vmatmul.f32.gmra.mxu0 %v1136
    %v1176 = vpop.f32.mrf.mxu0
    %v1177 = vadd.f32 0.0, %v1176
    %1178 = vmatmul.f32.gmra.mxu0 %v1139
    %v1179 = vpop.f32.mrf.mxu0
    %v1180 = vadd.f32 0.0, %v1179
    %1181 = vmatmul.f32.gmra.mxu0 %v1142
    %v1182 = vpop.f32.mrf.mxu0
    %v1183 = vadd.f32 0.0, %v1182
    %1184 = vmatmul.f32.gmra.mxu0 %v1145
    %v1185 = vpop.f32.mrf.mxu0
    %v1186 = vadd.f32 0.0, %v1185
    %1187 = vmatmul.f32.gmra.mxu0 %v1148
    %v1188 = vpop.f32.mrf.mxu0
    %v1189 = vadd.f32 0.0, %v1188
    %1190 = vdwg.mxu0
    %v1192 = vsel %vm1128, %v1069, 0
    %v1195 = vsel %vm1128, %v1070, 0
    %v1198 = vsel %vm1128, %v1071, 0
    %v1201 = vsel %vm1128, %v1072, 0
    %v1204 = vsel %vm1128, %v1073, 0
    %v1207 = vsel %vm1128, %v1074, 0
    %v1210 = vsel %vm1128, %v1075, 0
    %v1213 = vsel %vm82, %v1067, 0
    %1215 = vmatpush.msra.mxu0 0.0
    %1216 = vmatpush.msra.mxu0 0.0
    %1217 = vmatpush.msra.mxu0 0.0
    %1218 = vmatpush.msra.mxu0 0.0
    %1219 = vmatpush.msra.mxu0 0.0
    %1220 = vmatpush.msra.mxu0 0.0
    %1221 = vmatpush.msra.mxu0 0.0
    %1222 = vmatpush.msra.mxu0 0.0
    %1223 = vmatpush.msra.mxu0 0.0
    %1224 = vmatpush.msra.mxu0 0.0
    %1225 = vmatpush.msra.mxu0 0.0
    %1226 = vmatpush.msra.mxu0 0.0
    %1227 = vmatpush.msra.mxu0 %v1213
    %1228 = vmatpush.msra.mxu0 %v1064
    %1229 = vmatpush.msra.mxu0 %v1061
    %1230 = vmatpush.msra.mxu0 %v1058
    %1231 = vmatmul.f32.gmra.mxu0 %v1192
    %v1232 = vpop.f32.mrf.mxu0
    %v1233 = vadd.f32 %v1171, %v1232
    %1234 = vmatmul.f32.gmra.mxu0 %v1195
    %v1235 = vpop.f32.mrf.mxu0
    %v1236 = vadd.f32 %v1174, %v1235
    %1237 = vmatmul.f32.gmra.mxu0 %v1198
    %v1238 = vpop.f32.mrf.mxu0
    %v1239 = vadd.f32 %v1177, %v1238
    %1240 = vmatmul.f32.gmra.mxu0 %v1201
    %v1241 = vpop.f32.mrf.mxu0
    %v1242 = vadd.f32 %v1180, %v1241
    %1243 = vmatmul.f32.gmra.mxu0 %v1204
    %v1244 = vpop.f32.mrf.mxu0
    %v1245 = vadd.f32 %v1183, %v1244
    %1246 = vmatmul.f32.gmra.mxu0 %v1207
    %v1247 = vpop.f32.mrf.mxu0
    %v1248 = vadd.f32 %v1186, %v1247
    %1249 = vmatmul.f32.gmra.mxu0 %v1210
    %v1250 = vpop.f32.mrf.mxu0
    %v1251 = vadd.f32 %v1189, %v1250
    %1252 = vdwg.mxu0
    %s1253 = scalar_lea.vmem %s19, 224
    %v1254 = vld [vmem:[%s1253] sm:$0xff]
    %v1255 = vld [vmem:[%s1253 + $0x8] sm:$0xff]
    %v1256 = vld [vmem:[%s1253 + $0x10] sm:$0xff]
    %v1257 = vld [vmem:[%s1253 + $0x18] sm:$0xff]
    %v1258 = vld [vmem:[%s1253 + $0x20] sm:$0xff]
    %v1259 = vld [vmem:[%s1253 + $0x28] sm:$0xff]
    %v1260 = vld [vmem:[%s1253 + $0x30] sm:$0xff]
    %v1261 = vld [vmem:[%s1253 + $0x38] sm:$0xff]
    %v1262 = vld [vmem:[%s1253 + $0x40] sm:$0xff]
    %v1263 = vld [vmem:[%s1253 + $0x48] sm:$0xff]
    %v1264 = vld [vmem:[%s1253 + $0x50] sm:$0xff]
    %v1265 = vld [vmem:[%s1253 + $0x58] sm:$0xff]
    %v1266 = vld [vmem:[%s1253 + $0x60] sm:$0xff]
    %v1267 = vld [vmem:[%s1253 + $0x68] sm:$0xff]
    %1268 = vmatpush.msra.mxu0 0.0
    %1269 = vmatpush.msra.mxu0 0.0
    %1270 = vmatpush.msra.mxu0 %v1267
    %1271 = vmatpush.msra.mxu0 %v1266
    %1272 = vmatpush.msra.mxu0 %v1265
    %1273 = vmatpush.msra.mxu0 %v1264
    %1274 = vmatpush.msra.mxu0 %v1263
    %1275 = vmatpush.msra.mxu0 %v1262
    %1276 = vmatpush.msra.mxu0 %v1261
    %1277 = vmatpush.msra.mxu0 %v1260
    %1278 = vmatpush.msra.mxu0 %v1259
    %1279 = vmatpush.msra.mxu0 %v1258
    %1280 = vmatpush.msra.mxu0 %v1257
    %1281 = vmatpush.msra.mxu0 %v1256
    %1282 = vmatpush.msra.mxu0 %v1255
    %1283 = vmatpush.msra.mxu0 %v1254
    %1284 = vmatmul.f32.gmra.mxu0 %v1029
    %v1285 = vpop.f32.mrf.mxu0
    %v1286 = vadd.f32 0.0, %v1285
    %1287 = vmatmul.f32.gmra.mxu0 %v1032
    %v1288 = vpop.f32.mrf.mxu0
    %v1289 = vadd.f32 0.0, %v1288
    %1290 = vmatmul.f32.gmra.mxu0 %v1035
    %v1291 = vpop.f32.mrf.mxu0
    %v1292 = vadd.f32 0.0, %v1291
    %1293 = vmatmul.f32.gmra.mxu0 %v1038
    %v1294 = vpop.f32.mrf.mxu0
    %v1295 = vadd.f32 0.0, %v1294
    %1296 = vdwg.mxu0
    %s1297 = scalar_lea.vmem %s20, 112
    %v1298 = vld [vmem:[%s1297] sm:$0xff]
    %v1299 = vld [vmem:[%s1297 + $0x8] sm:$0xff]
    %v1300 = vld [vmem:[%s1297 + $0x10] sm:$0xff]
    %v1301 = vld [vmem:[%s1297 + $0x18] sm:$0xff]
    %v1302 = vld [vmem:[%s1297 + $0x20] sm:$0xff]
    %v1303 = vld [vmem:[%s1297 + $0x28] sm:$0xff]
    %v1304 = vld [vmem:[%s1297 + $0x30] sm:$0xff]
    %v1306 = vsel %vm1128, %v1298, 0
    %v1309 = vsel %vm1128, %v1299, 0
    %v1312 = vsel %vm1128, %v1300, 0
    %v1315 = vsel %vm1128, %v1301, 0
    %v1318 = vsel %vm1128, %v1302, 0
    %v1321 = vsel %vm1128, %v1303, 0
    %v1324 = vsel %vm1128, %v1304, 0
    %v1327 = vsel %vm82, %v1295, 0
    %1329 = vmatpush.msra.mxu0 0.0
    %1330 = vmatpush.msra.mxu0 0.0
    %1331 = vmatpush.msra.mxu0 0.0
    %1332 = vmatpush.msra.mxu0 0.0
    %1333 = vmatpush.msra.mxu0 0.0
    %1334 = vmatpush.msra.mxu0 0.0
    %1335 = vmatpush.msra.mxu0 0.0
    %1336 = vmatpush.msra.mxu0 0.0
    %1337 = vmatpush.msra.mxu0 0.0
    %1338 = vmatpush.msra.mxu0 0.0
    %1339 = vmatpush.msra.mxu0 0.0
    %1340 = vmatpush.msra.mxu0 0.0
    %1341 = vmatpush.msra.mxu0 %v1327
    %1342 = vmatpush.msra.mxu0 %v1292
    %1343 = vmatpush.msra.mxu0 %v1289
    %1344 = vmatpush.msra.mxu0 %v1286
    %1345 = vmatmul.f32.gmra.mxu0 %v1306
    %v1346 = vpop.f32.mrf.mxu0
    %v1347 = vadd.f32 0.0, %v1346
    %1348 = vmatmul.f32.gmra.mxu0 %v1309
    %v1349 = vpop.f32.mrf.mxu0
    %v1350 = vadd.f32 0.0, %v1349
    %1351 = vmatmul.f32.gmra.mxu0 %v1312
    %v1352 = vpop.f32.mrf.mxu0
    %v1353 = vadd.f32 0.0, %v1352
    %1354 = vmatmul.f32.gmra.mxu0 %v1315
    %v1355 = vpop.f32.mrf.mxu0
    %v1356 = vadd.f32 0.0, %v1355
    %1357 = vmatmul.f32.gmra.mxu0 %v1318
    %v1358 = vpop.f32.mrf.mxu0
    %v1359 = vadd.f32 0.0, %v1358
    %1360 = vmatmul.f32.gmra.mxu0 %v1321
    %v1361 = vpop.f32.mrf.mxu0
    %v1362 = vadd.f32 0.0, %v1361
    %1363 = vmatmul.f32.gmra.mxu0 %v1324
    %v1364 = vpop.f32.mrf.mxu0
    %v1365 = vadd.f32 0.0, %v1364
    %1366 = vdwg.mxu0
    %v1367 = vadd.f32 %v1233, %v1347
    %v1368 = vadd.f32 %v1236, %v1350
    %v1369 = vadd.f32 %v1239, %v1353
    %v1370 = vadd.f32 %v1242, %v1356
    %v1371 = vadd.f32 %v1245, %v1359
    %v1372 = vadd.f32 %v1248, %v1362
    %v1373 = vadd.f32 %v1251, %v1365
    %v1374 = vld [vmem:[%s21] sm:$0x1]
    %v1376 = vperm.slane %v1374, 0
    %v1378 = vadd.f32 %v1367, %v1376
    %v1379 = vadd.f32 %v1368, %v1376
    %v1380 = vadd.f32 %v1369, %v1376
    %v1381 = vadd.f32 %v1370, %v1376
    %v1382 = vadd.f32 %v1371, %v1376
    %v1383 = vadd.f32 %v1372, %v1376
    %v1384 = vadd.f32 %v1373, %v1376
    %v1385 = vxor.u32 %v1378, 2147483648
    %v1386 = vxor.u32 %v1379, 2147483648
    %v1387 = vxor.u32 %v1380, 2147483648
    %v1388 = vxor.u32 %v1381, 2147483648
    %v1389 = vxor.u32 %v1382, 2147483648
    %v1390 = vxor.u32 %v1383, 2147483648
    %v1391 = vxor.u32 %v1384, 2147483648
    %v1392 = vmul.f32 %v1385, 1.442695
    %v1393 = vpow.pop %v1392
    %v1394 = vmul.f32 %v1386, 1.442695
    %v1395 = vpow.pop %v1394
    %v1396 = vmul.f32 %v1387, 1.442695
    %v1397 = vpow.pop %v1396
    %v1398 = vmul.f32 %v1388, 1.442695
    %v1399 = vpow.pop %v1398
    %v1400 = vmul.f32 %v1389, 1.442695
    %v1401 = vpow.pop %v1400
    %v1402 = vmul.f32 %v1390, 1.442695
    %v1403 = vpow.pop %v1402
    %v1404 = vmul.f32 %v1391, 1.442695
    %v1405 = vpow.pop %v1404
    %v1406 = vadd.f32 %v1393, 1.0
    %v1407 = vadd.f32 %v1395, 1.0
    %v1408 = vadd.f32 %v1397, 1.0
    %v1409 = vadd.f32 %v1399, 1.0
    %v1410 = vadd.f32 %v1401, 1.0
    %v1411 = vadd.f32 %v1403, 1.0
    %v1412 = vadd.f32 %v1405, 1.0
    %v1413 = vrcp.pop %v1406
    %v1414 = vmul.f32 %v1406, %v1413
    %v1415 = vsub.f32 1.0, %v1414
    %v1416 = vmul.f32 %v1413, %v1415
    %v1417 = vadd.f32 %v1413, %v1416
    %vm1418 = vweird.f32 %v1406
    %vm1419 = vweird.f32 %v1413
    %vm1420 = vmor %vm1418, %vm1419
    %v1421 = vsel %vm1420, %v1413, %v1417
    %v1422 = vand.u32 2147483647, %v1406
    %vm1423 = vcmp.eq.f32.partialorder %v1422, 8.507059e+37
    %v1424 = vand.u32 %v1406, 2147483648
    %v1425 = vor.u32 1.1754944e-38, %v1424
    %v1426 = vsel %vm1423, %v1425, %v1421
    %v1427 = vmul.f32 1.0, %v1426
    %v1428 = vrcp.pop %v1407
    %v1429 = vmul.f32 %v1407, %v1428
    %v1430 = vsub.f32 1.0, %v1429
    %v1431 = vmul.f32 %v1428, %v1430
    %v1432 = vadd.f32 %v1428, %v1431
    %vm1433 = vweird.f32 %v1407
    %vm1434 = vweird.f32 %v1428
    %vm1435 = vmor %vm1433, %vm1434
    %v1436 = vsel %vm1435, %v1428, %v1432
    %v1437 = vand.u32 2147483647, %v1407
    %vm1438 = vcmp.eq.f32.partialorder %v1437, 8.507059e+37
    %v1439 = vand.u32 %v1407, 2147483648
    %v1440 = vor.u32 1.1754944e-38, %v1439
    %v1441 = vsel %vm1438, %v1440, %v1436
    %v1442 = vmul.f32 1.0, %v1441
    %v1443 = vrcp.pop %v1408
    %v1444 = vmul.f32 %v1408, %v1443
    %v1445 = vsub.f32 1.0, %v1444
    %v1446 = vmul.f32 %v1443, %v1445
    %v1447 = vadd.f32 %v1443, %v1446
    %vm1448 = vweird.f32 %v1408
    %vm1449 = vweird.f32 %v1443
    %vm1450 = vmor %vm1448, %vm1449
    %v1451 = vsel %vm1450, %v1443, %v1447
    %v1452 = vand.u32 2147483647, %v1408
    %vm1453 = vcmp.eq.f32.partialorder %v1452, 8.507059e+37
    %v1454 = vand.u32 %v1408, 2147483648
    %v1455 = vor.u32 1.1754944e-38, %v1454
    %v1456 = vsel %vm1453, %v1455, %v1451
    %v1457 = vmul.f32 1.0, %v1456
    %v1458 = vrcp.pop %v1409
    %v1459 = vmul.f32 %v1409, %v1458
    %v1460 = vsub.f32 1.0, %v1459
    %v1461 = vmul.f32 %v1458, %v1460
    %v1462 = vadd.f32 %v1458, %v1461
    %vm1463 = vweird.f32 %v1409
    %vm1464 = vweird.f32 %v1458
    %vm1465 = vmor %vm1463, %vm1464
    %v1466 = vsel %vm1465, %v1458, %v1462
    %v1467 = vand.u32 2147483647, %v1409
    %vm1468 = vcmp.eq.f32.partialorder %v1467, 8.507059e+37
    %v1469 = vand.u32 %v1409, 2147483648
    %v1470 = vor.u32 1.1754944e-38, %v1469
    %v1471 = vsel %vm1468, %v1470, %v1466
    %v1472 = vmul.f32 1.0, %v1471
    %v1473 = vrcp.pop %v1410
    %v1474 = vmul.f32 %v1410, %v1473
    %v1475 = vsub.f32 1.0, %v1474
    %v1476 = vmul.f32 %v1473, %v1475
    %v1477 = vadd.f32 %v1473, %v1476
    %vm1478 = vweird.f32 %v1410
    %vm1479 = vweird.f32 %v1473
    %vm1480 = vmor %vm1478, %vm1479
    %v1481 = vsel %vm1480, %v1473, %v1477
    %v1482 = vand.u32 2147483647, %v1410
    %vm1483 = vcmp.eq.f32.partialorder %v1482, 8.507059e+37
    %v1484 = vand.u32 %v1410, 2147483648
    %v1485 = vor.u32 1.1754944e-38, %v1484
    %v1486 = vsel %vm1483, %v1485, %v1481
    %v1487 = vmul.f32 1.0, %v1486
    %v1488 = vrcp.pop %v1411
    %v1489 = vmul.f32 %v1411, %v1488
    %v1490 = vsub.f32 1.0, %v1489
    %v1491 = vmul.f32 %v1488, %v1490
    %v1492 = vadd.f32 %v1488, %v1491
    %vm1493 = vweird.f32 %v1411
    %vm1494 = vweird.f32 %v1488
    %vm1495 = vmor %vm1493, %vm1494
    %v1496 = vsel %vm1495, %v1488, %v1492
    %v1497 = vand.u32 2147483647, %v1411
    %vm1498 = vcmp.eq.f32.partialorder %v1497, 8.507059e+37
    %v1499 = vand.u32 %v1411, 2147483648
    %v1500 = vor.u32 1.1754944e-38, %v1499
    %v1501 = vsel %vm1498, %v1500, %v1496
    %v1502 = vmul.f32 1.0, %v1501
    %v1503 = vrcp.pop %v1412
    %v1504 = vmul.f32 %v1412, %v1503
    %v1505 = vsub.f32 1.0, %v1504
    %v1506 = vmul.f32 %v1503, %v1505
    %v1507 = vadd.f32 %v1503, %v1506
    %vm1508 = vweird.f32 %v1412
    %vm1509 = vweird.f32 %v1503
    %vm1510 = vmor %vm1508, %vm1509
    %v1511 = vsel %vm1510, %v1503, %v1507
    %v1512 = vand.u32 2147483647, %v1412
    %vm1513 = vcmp.eq.f32.partialorder %v1512, 8.507059e+37
    %v1514 = vand.u32 %v1412, 2147483648
    %v1515 = vor.u32 1.1754944e-38, %v1514
    %v1516 = vsel %vm1513, %v1515, %v1511
    %v1517 = vmul.f32 1.0, %v1516
    %1518 = vst.msk [vmem:[#allocation3] sm:$0xff] %vm1128, %v1427
    %1519 = vst.msk [vmem:[#allocation3 + $0x8] sm:$0xff] %vm1128, %v1442
    %1520 = vst.msk [vmem:[#allocation3 + $0x10] sm:$0xff] %vm1128, %v1457
    %1521 = vst.msk [vmem:[#allocation3 + $0x18] sm:$0xff] %vm1128, %v1472
    %1522 = vst.msk [vmem:[#allocation3 + $0x20] sm:$0xff] %vm1128, %v1487
    %1523 = vst.msk [vmem:[#allocation3 + $0x28] sm:$0xff] %vm1128, %v1502
    %1524 = vst.msk [vmem:[#allocation3 + $0x30] sm:$0xff] %vm1128, %v1517
    // Predicated region
    $region90: #{decoder_forward.1} parent=1 // pred_check
      _
    $region91: #{decoder_forward.1} parent=1 // pred_check_branch
      %1526 = sbr.rel (0) target = $region93
    $region92: #{decoder_forward.1} parent=1 // pred_region
      %1528 = vsyncadd [#allocation4], 0
      %s1529 = sshll.u32 [#allocation3], 4
      %s1530 = int_to_ptr.vmem [resolvable:$true] %s1529
      %s1531 = sshll.u32 %s22, 4
      %s1532 = int_to_ptr.hbm [resolvable:$true] %s1531
      %1537 = dma.vmem_to_hbm [thread:$0]  %s1530, 896, %s1532, [#allocation4], 128, 128, 8
    $region93: #{decoder_forward.1} parent=1 // pred_fallthru
      _
    // Predicated region
    $region94: #{decoder_forward.1} parent=1 // pred_check
      _
    $region95: #{decoder_forward.1} parent=1 // pred_check_branch
      %1539 = sbr.rel (0) target = $region97
    $region96: #{decoder_forward.1} parent=1 // pred_region
      %1541 = dma.done [#allocation4], 896
    $region97: #{decoder_forward.1} parent=1 // pred_fallthru
      _
    %1542 = vsyncpa [#allocation4], 1

</llo_original>
